<compile_context>
chip_gen: v7x
topology: tpu7x:2x2x1
jax: 0.10.0
libtpu: 0.0.40
codegen_flags: <defaults>
</compile_context>

<pallas_src>
import functools

import jax
import jax.numpy as jnp
import numpy as np
from jax import lax
from jax.experimental import pallas as pl
from jax.experimental.pallas import tpu as pltpu

EPS = 1e-5  # BatchNorm2d default eps


def _round_up(x, m):
    return (x + m - 1) // m * m


def _vmem_limit_bytes():
    """Per-chip VMEM budget: leave headroom on v7x (64 MiB/TC), use more on v5e/v6e."""
    try:
        cap = int(pltpu.get_tpu_info().vmem_capacity_bytes)
    except Exception:
        return 48 * 1024 * 1024  # safe on every generation
    return int(max(32 * 1024 * 1024, min(cap - 16 * 1024 * 1024, 100 * 1024 * 1024)))


def conv_transpose_kernel(xf_ref, w_ref, o_ref, stats_ref, *, H, W, Wp, L):
    """One grid step = B_T images.

    xf_ref    : (B_T, Cin_p, Sflat) bf16  flattened zero-padded NCHW input (spatial on lanes)
    w_ref     : (4*Cout, 4*Cin_p)   bf16  fused phase/shift weight matrix
    o_ref     : (B_T, 4*Cout, Lpad) bf16  phase-major conv output (lane-dense, 128-aligned)
    stats_ref : (B_T, 4*Cout, 2)    f32   per-image BN partials: [:, :, 0]=sum, [:, :, 1]=m2
    """
    bt = o_ref.shape[0]
    cin = xf_ref.shape[1]
    Lpad = o_ref.shape[2]

    # Valid-lane mask: drop the flattening pad column (lane % Wp == W) and the tail pad
    # lanes [L, Lpad) that only exist for 128-lane alignment.
    lane = lax.broadcasted_iota(jnp.int32, (1, Lpad), 1)
    valid = (lane < L) & ((lane % Wp) < W)
    inv_cnt = 1.0 / (H * W)

    # Flat-lane offsets of the 4 input shifts (dr, dc): x[r+dr, c+dc].
    offs = (0, 1, Wp, Wp + 1)

    for b in range(bt):                      # static unroll, B_T is small
        acc = None
        for d in range(4):                   # 4 accumulating MXU dots -> no (4*Cin, L) concat temp
            xd = xf_ref[b, :, pl.ds(offs[d], Lpad)]            # (Cin_p, Lpad) bf16
            wd = w_ref[:, d * cin:(d + 1) * cin]               # (4*Cout, Cin_p) bf16
            t = jnp.dot(wd, xd, preferred_element_type=jnp.float32)
            acc = t if acc is None else acc + t                # f32 accumulator

        o_ref[b] = acc.astype(o_ref.dtype)                     # bf16 intermediate

        # Train-mode BatchNorm partials from the f32 accumulator (centered 2nd moment
        # avoids E[x^2]-E[x]^2 cancellation when combined across images in the wrapper).
        rsum = jnp.sum(jnp.where(valid, acc, 0.0), axis=1, keepdims=True)   # (4*Cout, 1)
        cent = acc - rsum * inv_cnt
        rm2 = jnp.sum(jnp.where(valid, cent * cent, 0.0), axis=1, keepdims=True)
        stats_ref[b] = jnp.concatenate([rsum, rm2], axis=1)    # single (4*Cout, 2) store


def conv_trans_block(x_nchw, w_t, b, gamma, beta,
                     kernel=3, stride=2, pad=1, output_pad=1, images_per_block=None):
    """Forward pass of ConvTransBlock. x_nchw: (N, Cin, H, W) -> (N, Cout, 2H, 2W)."""
    assert (kernel, stride, pad, output_pad) == (3, 2, 1, 1), (
        "phase-decomposed kernel is specialized to the module defaults")
    N, Cin, H, W = x_nchw.shape
    Cout = w_t.shape[1]
    Ho, Wo = 2 * H, 2 * W

    Wp = W + 1                                 # flattening width (one zero pad column)
    L = H * Wp                                 # valid flat extent per phase
    Lpad = _round_up(L, 128)                   # lane-dense (128-aligned) output extent
    Cin_p = _round_up(max(Cin, 8), 8)          # padded contraction dim (clean K per dot)
    Sflat = _round_up(Lpad + Wp + 1, 128)      # keeps the largest shifted load in-bounds

    # Images per grid step (amortizes per-step overhead; must divide N).
    # On v7x with very small N, prefer N // 2 so both TensorCores get a step.
    bt = images_per_block if images_per_block else min(N, 8)
    while N % bt:
        bt -= 1

    # ---- input prep (stays in XLA: ~Cout/Cin * 4x less HBM traffic than the conv output):
    # pad channels to Cin_p, add the flattening pad column, flatten, pad to Sflat, cast bf16.
    x = x_nchw.astype(jnp.float32)
    xf = jnp.pad(x, ((0, 0), (0, Cin_p - Cin), (0, 0), (0, 1))).reshape(N, Cin_p, L)
    xf = jnp.pad(xf, ((0, 0), (0, 0), (0, Sflat - L))).astype(jnp.bfloat16)

    # ---- fused phase/shift weight matrix (4*Cout, 4*Cin_p), bf16.
    #   row block p = (pe, pw): output phase  oh = 2r+pe, ow = 2c+pw
    #   col block d = (dr, dc): input shift   x[r+dr, c+dc]
    #   entry = W_t[ci, co, kh, kw] with kh = pe-2*dr+1, kw = pw-2*dc+1 (0 if out of range)
    wf = w_t.astype(jnp.float32)
    row_blocks = []
    for pe in range(2):
        for pw in range(2):
            col_blocks = []
            for dr in range(2):
                for dc in range(2):
                    kh = pe - 2 * dr + 1
                    kw = pw - 2 * dc + 1
                    if 0 <= kh < kernel and 0 <= kw < kernel:
                        blk = wf[:, :, kh, kw].T                       # (Cout, Cin)
                    else:
                        blk = jnp.zeros((Cout, Cin), jnp.float32)
                    col_blocks.append(jnp.pad(blk, ((0, 0), (0, Cin_p - Cin))))
            row_blocks.append(jnp.concatenate(col_blocks, axis=1))      # (Cout, 4*Cin_p)
    w_all = jnp.concatenate(row_blocks, axis=0).astype(jnp.bfloat16)    # (4*Cout, 4*Cin_p)

    # ConvTranspose2d bias dropped: under train-mode BatchNorm it shifts the per-channel
    # mean by exactly b and cancels from the normalized output.
    del b

    vmem_limit = _vmem_limit_bytes()

    # ---- kernel: phase-decomposed transposed conv + per-image BN partials (one pallas_call).
    conv_out, stats = pl.pallas_call(
        functools.partial(conv_transpose_kernel, H=H, W=W, Wp=Wp, L=L),
        out_shape=(jax.ShapeDtypeStruct((N, 4 * Cout, Lpad), jnp.bfloat16),
                   jax.ShapeDtypeStruct((N, 4 * Cout, 2), jnp.float32)),
        grid_spec=pltpu.PrefetchScalarGridSpec(
            num_scalar_prefetch=0,
            grid=(N // bt,),
            in_specs=[pl.BlockSpec((bt, Cin_p, Sflat), lambda n: (n, 0, 0)),
                      pl.BlockSpec((4 * Cout, 4 * Cin_p), lambda n: (0, 0))],
            out_specs=(pl.BlockSpec((bt, 4 * Cout, Lpad), lambda n: (n, 0, 0)),
                       pl.BlockSpec((bt, 4 * Cout, 2), lambda n: (n, 0, 0)))),
        compiler_params=pltpu.CompilerParams(
            dimension_semantics=("parallel",),     # per-image stats -> parallel batch axis
            vmem_limit_bytes=vmem_limit),
    )(xf, w_all)

    # ---- combine per-image partial stats (tiny XLA math). Biased batch variance.
    cnt = H * W
    G = N * 4
    total_cnt = G * cnt                               # == N * Ho * Wo
    gsum = stats[..., 0].reshape(G, Cout)
    gm2 = stats[..., 1].reshape(G, Cout)
    gmean = gsum / cnt
    mean = jnp.sum(gsum, axis=0) / total_cnt          # (Cout,)
    m2 = jnp.sum(gm2, axis=0) + cnt * jnp.sum((gmean - mean) ** 2, axis=0)
    var = m2 / total_cnt
    inv_std = lax.rsqrt(var + EPS)
    scale = gamma.astype(jnp.float32) * inv_std
    shift = beta.astype(jnp.float32) - mean * scale
    # TODO(synk): BatchNorm2d running_mean/running_var buffer updates (training-state
    # side effect) are not emitted; the forward output is unaffected.

    # ---- BN affine + ReLU fused by XLA into the single pixel-shuffle pass:
    # one bf16 read of the intermediate + one write of the final output, no extra pass.
    y = conv_out[:, :, :L].reshape(N, 2, 2, Cout, H, Wp)[..., :W].astype(jnp.float32)
    y = jnp.maximum(y * scale.reshape(1, 1, 1, Cout, 1, 1)
                    + shift.reshape(1, 1, 1, Cout, 1, 1), 0.0)
    y = jnp.transpose(y, (0, 3, 4, 1, 5, 2))          # (N, Cout, H, pe, W, pw)
    return y.reshape(N, Cout, Ho, Wo)


def reference(x_nchw, w_t, b, gamma, beta, kernel=3, stride=2, pad=1, output_pad=1):
    """Independent pure-JAX reference (XLA conv, bias included) of the PyTorch forward."""
    Cout = w_t.shape[1]
    w_oihw = jnp.transpose(w_t[:, :, ::-1, ::-1], (1, 0, 2, 3))
    y = lax.conv_general_dilated(
        x_nchw, w_oihw, window_strides=(1, 1),
        padding=[(kernel - 1 - pad, kernel - 1 - pad + output_pad)] * 2,
        lhs_dilation=(stride, stride),
        dimension_numbers=('NCHW', 'OIHW', 'NCHW'))
    y = y + b.reshape(1, Cout, 1, 1)
    mean = jnp.mean(y, axis=(0, 2, 3), keepdims=True)
    var = jnp.mean((y - mean) ** 2, axis=(0, 2, 3), keepdims=True)
    y = (y - mean) / jnp.sqrt(var + EPS)
    y = y * gamma.reshape(1, Cout, 1, 1) + beta.reshape(1, Cout, 1, 1)
    return jnp.maximum(y, 0.0)


if __name__ == "__main__":
    key = jax.random.PRNGKey(0)
    k1, k2, k3, k4, k5 = jax.random.split(key, 5)

    N, Cin, H, W = 2, 4, 16, 16
    Cout = 8

    # deterministic synthetic parameters (shapes match nn.ConvTranspose2d / nn.BatchNorm2d)
    x = jax.random.normal(k1, (N, Cin, H, W), jnp.float32)
    w_t = 0.1 * jax.random.normal(k2, (Cin, Cout, 3, 3), jnp.float32)   # ConvTranspose2d.weight
    b = 0.1 * jax.random.normal(k3, (Cout,), jnp.float32)               # ConvTranspose2d.bias
    gamma = 1.0 + 0.1 * jax.random.normal(k4, (Cout,), jnp.float32)     # BatchNorm2d.weight
    beta = 0.1 * jax.random.normal(k5, (Cout,), jnp.float32)            # BatchNorm2d.bias

    fwd = jax.jit(conv_trans_block)
    out = jax.block_until_ready(fwd(x, w_t, b, gamma, beta))
    assert out.shape == (N, Cout, 2 * H, 2 * W), out.shape

    ref = reference(x, w_t, b, gamma, beta)
    # bf16 operands + bf16 intermediate (stats from the f32 accumulator) -> ~1e-2 abs error
    # vs the f32 reference after normalization.
    np.testing.assert_allclose(np.asarray(out), np.asarray(ref), atol=5e-2, rtol=5e-2)

    print("KERNEL_OK")
</pallas_src>

<mosaic_0001>
module attributes {stable_mosaic.version = 11 : i64} {
  func.func @conv_transpose_kernel(%arg0: i32, %arg1: memref<2x8x512xbf16, #tpu.memory_space<vmem>>, %arg2: memref<32x32xbf16, #tpu.memory_space<vmem>>, %arg3: memref<2x32x384xbf16, #tpu.memory_space<vmem>>, %arg4: memref<2x32x2xf32, #tpu.memory_space<vmem>>) attributes {dimension_semantics = [#tpu.dimension_semantics<parallel>], iteration_bounds = array<i64: 1>, scalar_prefetch = 0 : i64, scratch_operands = 0 : i64, tpu.core_type = #tpu.core_type<tc>, window_params = [{transform_indices = @transform_0, window_bounds = array<i64: 2, 8, 512>}, {pipeline_mode = #tpu.pipeline_mode<synchronous>, transform_indices = @transform_1, window_bounds = array<i64: 32, 32>}, {transform_indices = @transform_2, window_bounds = array<i64: 2, 32, 384>}, {transform_indices = @transform_3, window_bounds = array<i64: 2, 32, 2>}]} {
    %0 = tpu.iota {dimensions = array<i32: 1>} : vector<1x384xi32>
    %c272_i32 = arith.constant 272 : i32
    %1 = vector.broadcast %c272_i32 : i32 to vector<1x384xi32>
    %2 = arith.cmpi slt, %0, %1 : vector<1x384xi32>
    %c17_i32 = arith.constant 17 : i32
    %c0_i32 = arith.constant 0 : i32
    %3 = arith.cmpi eq, %c17_i32, %c0_i32 : i32
    %c1_i32 = arith.constant 1 : i32
    %4 = arith.select %3, %c1_i32, %c17_i32 : i32
    %5 = vector.broadcast %4 : i32 to vector<1x384xi32>
    %6 = arith.remsi %0, %5 : vector<1x384xi32>
    %c0_i32_0 = arith.constant 0 : i32
    %7 = vector.broadcast %c0_i32_0 : i32 to vector<1x384xi32>
    %8 = arith.cmpi ne, %6, %7 : vector<1x384xi32>
    %c0_i32_1 = arith.constant 0 : i32
    %9 = vector.broadcast %c0_i32_1 : i32 to vector<1x384xi32>
    %10 = arith.cmpi slt, %6, %9 : vector<1x384xi32>
    %c0_i32_2 = arith.constant 0 : i32
    %11 = arith.cmpi slt, %4, %c0_i32_2 : i32
    %12 = vector.broadcast %11 : i1 to vector<1x384xi1>
    %13 = vector.broadcast %12 : vector<1x384xi1> to vector<1x384xi1>
    %14 = arith.xori %10, %13 : vector<1x384xi1>
    %15 = arith.andi %14, %8 : vector<1x384xi1>
    %16 = vector.broadcast %4 : i32 to vector<1x384xi32>
    %17 = arith.addi %6, %16 : vector<1x384xi32>
    %18 = arith.select %15, %17, %6 : vector<1x384xi1>, vector<1x384xi32>
    %c16_i32 = arith.constant 16 : i32
    %19 = vector.broadcast %c16_i32 : i32 to vector<1x384xi32>
    %20 = arith.cmpi slt, %18, %19 : vector<1x384xi32>
    %21 = arith.andi %2, %20 : vector<1x384xi1>
    %c0 = arith.constant 0 : index
    %c0_3 = arith.constant 0 : index
    %c0_4 = arith.constant 0 : index
    %22 = vector.load %arg1[%c0, %c0_3, %c0_4] : memref<2x8x512xbf16, #tpu.memory_space<vmem>>, vector<1x8x384xbf16>
    %23 = vector.shape_cast %22 : vector<1x8x384xbf16> to vector<8x384xbf16>
    %c0_5 = arith.constant 0 : index
    %c0_6 = arith.constant 0 : index
    %24 = vector.load %arg2[%c0_5, %c0_6] : memref<32x32xbf16, #tpu.memory_space<vmem>>, vector<32x8xbf16>
    %cst = arith.constant dense<0.000000e+00> : vector<32x384xf32>
    %25 = tpu.matmul %24, %23, %cst {dimension_numbers = #tpu.dot_dimension_numbers<[1], [0], [0], [1], [0, 0, 1, 1], [], []>} : vector<32x8xbf16>, vector<8x384xbf16>, vector<32x384xf32> -> vector<32x384xf32>
    %c0_7 = arith.constant 0 : index
    %c0_8 = arith.constant 0 : index
    %c1 = arith.constant 1 : index
    %26 = vector.load %arg1[%c0_7, %c0_8, %c1] : memref<2x8x512xbf16, #tpu.memory_space<vmem>>, vector<1x8x384xbf16>
    %27 = vector.shape_cast %26 : vector<1x8x384xbf16> to vector<8x384xbf16>
    %c0_9 = arith.constant 0 : index
    %c8 = arith.constant 8 : index
    %28 = vector.load %arg2[%c0_9, %c8] : memref<32x32xbf16, #tpu.memory_space<vmem>>, vector<32x8xbf16>
    %cst_10 = arith.constant dense<0.000000e+00> : vector<32x384xf32>
    %29 = tpu.matmul %28, %27, %cst_10 {dimension_numbers = #tpu.dot_dimension_numbers<[1], [0], [0], [1], [0, 0, 1, 1], [], []>} : vector<32x8xbf16>, vector<8x384xbf16>, vector<32x384xf32> -> vector<32x384xf32>
    %30 = arith.addf %25, %29 : vector<32x384xf32>
    %c0_11 = arith.constant 0 : index
    %c0_12 = arith.constant 0 : index
    %c17 = arith.constant 17 : index
    %31 = vector.load %arg1[%c0_11, %c0_12, %c17] : memref<2x8x512xbf16, #tpu.memory_space<vmem>>, vector<1x8x384xbf16>
    %32 = vector.shape_cast %31 : vector<1x8x384xbf16> to vector<8x384xbf16>
    %c0_13 = arith.constant 0 : index
    %c16 = arith.constant 16 : index
    %33 = vector.load %arg2[%c0_13, %c16] : memref<32x32xbf16, #tpu.memory_space<vmem>>, vector<32x8xbf16>
    %cst_14 = arith.constant dense<0.000000e+00> : vector<32x384xf32>
    %34 = tpu.matmul %33, %32, %cst_14 {dimension_numbers = #tpu.dot_dimension_numbers<[1], [0], [0], [1], [0, 0, 1, 1], [], []>} : vector<32x8xbf16>, vector<8x384xbf16>, vector<32x384xf32> -> vector<32x384xf32>
    %35 = arith.addf %30, %34 : vector<32x384xf32>
    %c0_15 = arith.constant 0 : index
    %c0_16 = arith.constant 0 : index
    %c18 = arith.constant 18 : index
    %36 = vector.load %arg1[%c0_15, %c0_16, %c18] : memref<2x8x512xbf16, #tpu.memory_space<vmem>>, vector<1x8x384xbf16>
    %37 = vector.shape_cast %36 : vector<1x8x384xbf16> to vector<8x384xbf16>
    %c0_17 = arith.constant 0 : index
    %c24 = arith.constant 24 : index
    %38 = vector.load %arg2[%c0_17, %c24] : memref<32x32xbf16, #tpu.memory_space<vmem>>, vector<32x8xbf16>
    %cst_18 = arith.constant dense<0.000000e+00> : vector<32x384xf32>
    %39 = tpu.matmul %38, %37, %cst_18 {dimension_numbers = #tpu.dot_dimension_numbers<[1], [0], [0], [1], [0, 0, 1, 1], [], []>} : vector<32x8xbf16>, vector<8x384xbf16>, vector<32x384xf32> -> vector<32x384xf32>
    %40 = arith.addf %35, %39 : vector<32x384xf32>
    %41 = arith.truncf %40 : vector<32x384xf32> to vector<32x384xbf16>
    %c0_19 = arith.constant 0 : index
    %c0_20 = arith.constant 0 : index
    %c0_21 = arith.constant 0 : index
    %42 = vector.load %arg3[%c0_19, %c0_20, %c0_21] : memref<2x32x384xbf16, #tpu.memory_space<vmem>>, vector<1x32x384xbf16>
    %43 = vector.shape_cast %42 : vector<1x32x384xbf16> to vector<32x384xbf16>
    %44 = vector.shape_cast %41 : vector<32x384xbf16> to vector<1x32x384xbf16>
    tpu.vector_store %arg3[%c0_19, %c0_20, %c0_21], %44 {strides = array<i32>} : memref<2x32x384xbf16, #tpu.memory_space<vmem>>, vector<1x32x384xbf16>,
    %cst_22 = arith.constant 0.000000e+00 : f32
    %45 = vector.shape_cast %21 : vector<1x384xi1> to vector<1x384xi1>
    %46 = vector.broadcast %45 : vector<1x384xi1> to vector<32x384xi1>
    %47 = vector.broadcast %cst_22 : f32 to vector<32x384xf32>
    %48 = arith.select %46, %40, %47 : vector<32x384xi1>, vector<32x384xf32>
    %cst_23 = arith.constant dense<0.000000e+00> : vector<32xf32>
    %49 = vector.multi_reduction <add>, %48, %cst_23 [1] : vector<32x384xf32> to vector<32xf32>
    %50 = vector.shape_cast %49 : vector<32xf32> to vector<32x1xf32>
    %cst_24 = arith.constant 3.906250e-03 : f32
    %51 = vector.broadcast %cst_24 : f32 to vector<32x1xf32>
    %52 = arith.mulf %50, %51 : vector<32x1xf32>
    %53 = vector.broadcast %52 : vector<32x1xf32> to vector<32x384xf32>
    %54 = arith.subf %40, %53 : vector<32x384xf32>
    %55 = arith.mulf %54, %54 : vector<32x384xf32>
    %cst_25 = arith.constant 0.000000e+00 : f32
    %56 = vector.shape_cast %21 : vector<1x384xi1> to vector<1x384xi1>
    %57 = vector.broadcast %56 : vector<1x384xi1> to vector<32x384xi1>
    %58 = vector.broadcast %cst_25 : f32 to vector<32x384xf32>
    %59 = arith.select %57, %55, %58 : vector<32x384xi1>, vector<32x384xf32>
    %cst_26 = arith.constant dense<0.000000e+00> : vector<32xf32>
    %60 = vector.multi_reduction <add>, %59, %cst_26 [1] : vector<32x384xf32> to vector<32xf32>
    %61 = vector.shape_cast %60 : vector<32xf32> to vector<32x1xf32>
    %62 = tpu.concatenate %50, %61 in 1 : vector<32x1xf32>, vector<32x1xf32> -> vector<32x2xf32>
    %c0_27 = arith.constant 0 : index
    %c0_28 = arith.constant 0 : index
    %c0_29 = arith.constant 0 : index
    %63 = vector.load %arg4[%c0_27, %c0_28, %c0_29] : memref<2x32x2xf32, #tpu.memory_space<vmem>>, vector<1x32x2xf32>
    %64 = vector.shape_cast %63 : vector<1x32x2xf32> to vector<32x2xf32>
    %65 = vector.shape_cast %62 : vector<32x2xf32> to vector<1x32x2xf32>
    tpu.vector_store %arg4[%c0_27, %c0_28, %c0_29], %65 {strides = array<i32>} : memref<2x32x2xf32, #tpu.memory_space<vmem>>, vector<1x32x2xf32>,
    %c1_30 = arith.constant 1 : index
    %c0_31 = arith.constant 0 : index
    %c0_32 = arith.constant 0 : index
    %66 = vector.load %arg1[%c1_30, %c0_31, %c0_32] : memref<2x8x512xbf16, #tpu.memory_space<vmem>>, vector<1x8x384xbf16>
    %67 = vector.shape_cast %66 : vector<1x8x384xbf16> to vector<8x384xbf16>
    %c0_33 = arith.constant 0 : index
    %c0_34 = arith.constant 0 : index
    %68 = vector.load %arg2[%c0_33, %c0_34] : memref<32x32xbf16, #tpu.memory_space<vmem>>, vector<32x8xbf16>
    %cst_35 = arith.constant dense<0.000000e+00> : vector<32x384xf32>
    %69 = tpu.matmul %68, %67, %cst_35 {dimension_numbers = #tpu.dot_dimension_numbers<[1], [0], [0], [1], [0, 0, 1, 1], [], []>} : vector<32x8xbf16>, vector<8x384xbf16>, vector<32x384xf32> -> vector<32x384xf32>
    %c1_36 = arith.constant 1 : index
    %c0_37 = arith.constant 0 : index
    %c1_38 = arith.constant 1 : index
    %70 = vector.load %arg1[%c1_36, %c0_37, %c1_38] : memref<2x8x512xbf16, #tpu.memory_space<vmem>>, vector<1x8x384xbf16>
    %71 = vector.shape_cast %70 : vector<1x8x384xbf16> to vector<8x384xbf16>
    %c0_39 = arith.constant 0 : index
    %c8_40 = arith.constant 8 : index
    %72 = vector.load %arg2[%c0_39, %c8_40] : memref<32x32xbf16, #tpu.memory_space<vmem>>, vector<32x8xbf16>
    %cst_41 = arith.constant dense<0.000000e+00> : vector<32x384xf32>
    %73 = tpu.matmul %72, %71, %cst_41 {dimension_numbers = #tpu.dot_dimension_numbers<[1], [0], [0], [1], [0, 0, 1, 1], [], []>} : vector<32x8xbf16>, vector<8x384xbf16>, vector<32x384xf32> -> vector<32x384xf32>
    %74 = arith.addf %69, %73 : vector<32x384xf32>
    %c1_42 = arith.constant 1 : index
    %c0_43 = arith.constant 0 : index
    %c17_44 = arith.constant 17 : index
    %75 = vector.load %arg1[%c1_42, %c0_43, %c17_44] : memref<2x8x512xbf16, #tpu.memory_space<vmem>>, vector<1x8x384xbf16>
    %76 = vector.shape_cast %75 : vector<1x8x384xbf16> to vector<8x384xbf16>
    %c0_45 = arith.constant 0 : index
    %c16_46 = arith.constant 16 : index
    %77 = vector.load %arg2[%c0_45, %c16_46] : memref<32x32xbf16, #tpu.memory_space<vmem>>, vector<32x8xbf16>
    %cst_47 = arith.constant dense<0.000000e+00> : vector<32x384xf32>
    %78 = tpu.matmul %77, %76, %cst_47 {dimension_numbers = #tpu.dot_dimension_numbers<[1], [0], [0], [1], [0, 0, 1, 1], [], []>} : vector<32x8xbf16>, vector<8x384xbf16>, vector<32x384xf32> -> vector<32x384xf32>
    %79 = arith.addf %74, %78 : vector<32x384xf32>
    %c1_48 = arith.constant 1 : index
    %c0_49 = arith.constant 0 : index
    %c18_50 = arith.constant 18 : index
    %80 = vector.load %arg1[%c1_48, %c0_49, %c18_50] : memref<2x8x512xbf16, #tpu.memory_space<vmem>>, vector<1x8x384xbf16>
    %81 = vector.shape_cast %80 : vector<1x8x384xbf16> to vector<8x384xbf16>
    %c0_51 = arith.constant 0 : index
    %c24_52 = arith.constant 24 : index
    %82 = vector.load %arg2[%c0_51, %c24_52] : memref<32x32xbf16, #tpu.memory_space<vmem>>, vector<32x8xbf16>
    %cst_53 = arith.constant dense<0.000000e+00> : vector<32x384xf32>
    %83 = tpu.matmul %82, %81, %cst_53 {dimension_numbers = #tpu.dot_dimension_numbers<[1], [0], [0], [1], [0, 0, 1, 1], [], []>} : vector<32x8xbf16>, vector<8x384xbf16>, vector<32x384xf32> -> vector<32x384xf32>
    %84 = arith.addf %79, %83 : vector<32x384xf32>
    %85 = arith.truncf %84 : vector<32x384xf32> to vector<32x384xbf16>
    %c1_54 = arith.constant 1 : index
    %c0_55 = arith.constant 0 : index
    %c0_56 = arith.constant 0 : index
    %86 = vector.load %arg3[%c1_54, %c0_55, %c0_56] : memref<2x32x384xbf16, #tpu.memory_space<vmem>>, vector<1x32x384xbf16>
    %87 = vector.shape_cast %86 : vector<1x32x384xbf16> to vector<32x384xbf16>
    %88 = vector.shape_cast %85 : vector<32x384xbf16> to vector<1x32x384xbf16>
    tpu.vector_store %arg3[%c1_54, %c0_55, %c0_56], %88 {strides = array<i32>} : memref<2x32x384xbf16, #tpu.memory_space<vmem>>, vector<1x32x384xbf16>,
    %cst_57 = arith.constant 0.000000e+00 : f32
    %89 = vector.shape_cast %21 : vector<1x384xi1> to vector<1x384xi1>
    %90 = vector.broadcast %89 : vector<1x384xi1> to vector<32x384xi1>
    %91 = vector.broadcast %cst_57 : f32 to vector<32x384xf32>
    %92 = arith.select %90, %84, %91 : vector<32x384xi1>, vector<32x384xf32>
    %cst_58 = arith.constant dense<0.000000e+00> : vector<32xf32>
    %93 = vector.multi_reduction <add>, %92, %cst_58 [1] : vector<32x384xf32> to vector<32xf32>
    %94 = vector.shape_cast %93 : vector<32xf32> to vector<32x1xf32>
    %cst_59 = arith.constant 3.906250e-03 : f32
    %95 = vector.broadcast %cst_59 : f32 to vector<32x1xf32>
    %96 = arith.mulf %94, %95 : vector<32x1xf32>
    %97 = vector.broadcast %96 : vector<32x1xf32> to vector<32x384xf32>
    %98 = arith.subf %84, %97 : vector<32x384xf32>
    %99 = arith.mulf %98, %98 : vector<32x384xf32>
    %cst_60 = arith.constant 0.000000e+00 : f32
    %100 = vector.shape_cast %21 : vector<1x384xi1> to vector<1x384xi1>
    %101 = vector.broadcast %100 : vector<1x384xi1> to vector<32x384xi1>
    %102 = vector.broadcast %cst_60 : f32 to vector<32x384xf32>
    %103 = arith.select %101, %99, %102 : vector<32x384xi1>, vector<32x384xf32>
    %cst_61 = arith.constant dense<0.000000e+00> : vector<32xf32>
    %104 = vector.multi_reduction <add>, %103, %cst_61 [1] : vector<32x384xf32> to vector<32xf32>
    %105 = vector.shape_cast %104 : vector<32xf32> to vector<32x1xf32>
    %106 = tpu.concatenate %94, %105 in 1 : vector<32x1xf32>, vector<32x1xf32> -> vector<32x2xf32>
    %c1_62 = arith.constant 1 : index
    %c0_63 = arith.constant 0 : index
    %c0_64 = arith.constant 0 : index
    %107 = vector.load %arg4[%c1_62, %c0_63, %c0_64] : memref<2x32x2xf32, #tpu.memory_space<vmem>>, vector<1x32x2xf32>
    %108 = vector.shape_cast %107 : vector<1x32x2xf32> to vector<32x2xf32>
    %109 = vector.shape_cast %106 : vector<32x2xf32> to vector<1x32x2xf32>
    tpu.vector_store %arg4[%c1_62, %c0_63, %c0_64], %109 {strides = array<i32>} : memref<2x32x2xf32, #tpu.memory_space<vmem>>, vector<1x32x2xf32>,
    return
  }
  func.func @transform_0(%arg0: i32) -> (i32, i32, i32) {
    %c0_i32 = arith.constant 0 : i32
    %c0_i32_0 = arith.constant 0 : i32
    %c0_i32_1 = arith.constant 0 : i32
    return %arg0, %c0_i32, %c0_i32_0 : i32, i32, i32
  }
  func.func @transform_1(%arg0: i32) -> (i32, i32) {
    %c0_i32 = arith.constant 0 : i32
    %c0_i32_0 = arith.constant 0 : i32
    %c0_i32_1 = arith.constant 0 : i32
    return %c0_i32, %c0_i32_0 : i32, i32
  }
  func.func @transform_2(%arg0: i32) -> (i32, i32, i32) {
    %c0_i32 = arith.constant 0 : i32
    %c0_i32_0 = arith.constant 0 : i32
    %c0_i32_1 = arith.constant 0 : i32
    return %arg0, %c0_i32, %c0_i32_0 : i32, i32, i32
  }
  func.func @transform_3(%arg0: i32) -> (i32, i32, i32) {
    %c0_i32 = arith.constant 0 : i32
    %c0_i32_0 = arith.constant 0 : i32
    %c0_i32_1 = arith.constant 0 : i32
    return %arg0, %c0_i32, %c0_i32_0 : i32, i32, i32
  }
}

</mosaic_0001>

<llo_original>
// kernel: squeeze.20
$region0: #{squeeze.20}
  %s0 = inlined_call_operand.vmem [shape: f32[2,32], index: 0, kind: input, shape index: {}]
  %s1 = inlined_call_operand.vmem [shape: f32[8,8], index: 1, kind: output, shape index: {}]
  $region1: #{squeeze.20} parent=0
    #allocation0 [shape = 'u8[4096]{0}', space=vmem, size = 0x1000, scoped, tag = 'scoped mem for input reshape']
    %s3 = sshllo.u32 0, 2
    %v4 = vld [vmem:[%s0] sm:%s3]
    %5 = vst [vmem:[#allocation0] sm:%s3] %v4
    %v6 = vld [vmem:[#allocation0] sm:$0x3]
    %vm7 = vcmask 64512
    %8 = vst.msk [vmem:[%s1] ss:$4 sm:$0x3] %vm7, %v6
    %v9 = vld [vmem:[#allocation0] sm:$0x3]
    %10 = vrot.lane.b32.xlu0 %v9, 120
    %v11 = vpop.permute.xlu0 %10
    %vm12 = vcmask 64512
    %s13 = scalar_lea.vmem %s1, 1
    %14 = vst.msk [vmem:[%s13] ss:$4 sm:$0x3] %vm12, %v11
    %v15 = vld [vmem:[#allocation0] sm:$0x3]
    %16 = vrot.lane.b32.xlu0 %v15, 112
    %v17 = vpop.permute.xlu0 %16
    %vm18 = vcmask 64512
    %s19 = scalar_lea.vmem %s1, 2
    %20 = vst.msk [vmem:[%s19] ss:$4 sm:$0x3] %vm18, %v17
    %v21 = vld [vmem:[#allocation0] sm:$0x3]
    %22 = vrot.lane.b32.xlu0 %v21, 104
    %v23 = vpop.permute.xlu0 %22
    %vm24 = vcmask 64512
    %s25 = scalar_lea.vmem %s1, 3
    %26 = vst.msk [vmem:[%s25] ss:$4 sm:$0x3] %vm24, %v23

// kernel: conv_trans_block.1
$region0: #{conv_trans_block.1}
  #allocation0 [shape = 'u32[]', space=smem, size = 0x4, offset = 0x4, fixed_abs, tag = 'smem constant byte address 0x4 - core index']
  #allocation1 [shape = 'u32[144,128]{1,0:T(1,128)}', space=vmem, size = 0x12000, scoped, tag = 'internal scratch']
  %s0 = inlined_call_operand.vmem [shape: bf16[2,8,512], index: 0, kind: input, shape index: {}]
  %s1 = inlined_call_operand.vmem [shape: bf16[32,32], index: 1, kind: input, shape index: {}]
  %s2 = inlined_call_operand.vmem [shape: bf16[2,32,384], index: 2, kind: output, shape index: {0}]
  %s3 = inlined_call_operand.vmem [shape: f32[2,32,2], index: 3, kind: output, shape index: {1}]
  %4 = xla_tuple %s2, %s3
  %s5 = sld [smem:[#allocation0]]
  $region26: #{conv_trans_block.1} parent=0
    _
  %s7 = ssub.s32 1, %s5
  %s8 = scalar_select 0, %s7, %s5
  // Predicated region
  $region2: #{conv_trans_block.1} parent=0 // pred_check
    _
  $region3: #{conv_trans_block.1} parent=0 // pred_check_branch
    %10 = sbr.rel (0) target = $region5
  $region4: #{conv_trans_block.1} parent=0 // pred_region
    _
  $region5: #{conv_trans_block.1} parent=0 // pred_fallthru
    _
  // Predicated region
  $region6: #{conv_trans_block.1} parent=0 // pred_check
    _
  $region7: #{conv_trans_block.1} parent=0 // pred_check_branch
    %12 = sbr.rel (0) target = $region9
  $region8: #{conv_trans_block.1} parent=0 // pred_region
    _
  $region9: #{conv_trans_block.1} parent=0 // pred_fallthru
    _
  %v14 = vlaneseq
  %v15 = vand.u32 %v14, 127
  %v16 = vadd.s32 %v15, 128
  %v17 = vadd.s32 %v15, 256
  %vm18 = vcmp.lt.s32.totalorder %v15, 272
  %vm19 = vcmp.lt.s32.totalorder %v16, 272
  %vm20 = vcmp.lt.s32.totalorder %v17, 272
  %vm21 = vcmp.lt.s32.totalorder %v15, 0
  %v22 = vsub.s32 0, %v15
  %v23 = vsel %vm21, %v22, %v15
  %v24 = vmul.u32.u64.compose %v23, 4042322161
  %v25 = vextract.low.u32 %v24
  %v26 = vextract.high.u32 %v24
  %v27 = vshrl.u32 %v26, 4
  %v28 = vmul.u32 %v27, 17
  %v29 = vsub.s32 %v23, %v28
  %v30 = vsub.s32 0, %v29
  %v31 = vsel %vm21, %v30, %v29
  %vm32 = vcmp.lt.s32.totalorder %v16, 0
  %v33 = vsub.s32 0, %v16
  %v34 = vsel %vm32, %v33, %v16
  %v35 = vmul.u32.u64.compose %v34, 4042322161
  %v36 = vextract.low.u32 %v35
  %v37 = vextract.high.u32 %v35
  %v38 = vshrl.u32 %v37, 4
  %v39 = vmul.u32 %v38, 17
  %v40 = vsub.s32 %v34, %v39
  %v41 = vsub.s32 0, %v40
  %v42 = vsel %vm32, %v41, %v40
  %vm43 = vcmp.lt.s32.totalorder %v17, 0
  %v44 = vsub.s32 0, %v17
  %v45 = vsel %vm43, %v44, %v17
  %v46 = vmul.u32.u64.compose %v45, 4042322161
  %v47 = vextract.low.u32 %v46
  %v48 = vextract.high.u32 %v46
  %v49 = vshrl.u32 %v48, 4
  %v50 = vmul.u32 %v49, 17
  %v51 = vsub.s32 %v45, %v50
  %v52 = vsub.s32 0, %v51
  %v53 = vsel %vm43, %v52, %v51
  %vm54 = vcmp.ne.s32.totalorder %v31, 0
  %vm55 = vcmp.ne.s32.totalorder %v42, 0
  %vm56 = vcmp.ne.s32.totalorder %v53, 0
  %vm57 = vcmp.lt.s32.totalorder %v31, 0
  %vm58 = vcmp.lt.s32.totalorder %v42, 0
  %vm59 = vcmp.lt.s32.totalorder %v53, 0
  %vm60 = vmand %vm57, %vm54
  %vm61 = vmand %vm58, %vm55
  %vm62 = vmand %vm59, %vm56
  %v63 = vadd.s32 %v31, 17
  %v64 = vadd.s32 %v42, 17
  %v65 = vadd.s32 %v53, 17
  %v66 = vsel %vm60, %v63, %v31
  %v67 = vsel %vm61, %v64, %v42
  %v68 = vsel %vm62, %v65, %v53
  %vm69 = vcmp.lt.s32.totalorder %v66, 16
  %vm70 = vcmp.lt.s32.totalorder %v67, 16
  %vm71 = vcmp.lt.s32.totalorder %v68, 16
  %vm72 = vmand %vm18, %vm69
  %vm73 = vmand %vm19, %vm70
  %vm74 = vmand %vm20, %vm71
  %v75 = vld [vmem:[%s0] sm:$0xff]
  %v76 = vld [vmem:[%s0 + $0x8] sm:$0xf]
  %v77 = vld [vmem:[%s1] sm:$0xf]
  %v78 = vld [vmem:[%s1 + $0x4] sm:$0xf]
  %v79 = vld [vmem:[%s1 + $0x8] sm:$0xf]
  %v80 = vld [vmem:[%s1 + $0xc] sm:$0xf]
  %v81 = vld [vmem:[%s0 + $0x8] sm:$0xff]
  %v86 = vunpack.c.l.b16 %v77
  %v87 = vunpack.c.l.b16 %v78
  %v88 = vunpack.c.l.b16 %v79
  %v89 = vunpack.c.l.b16 %v80
  %v90 = vpack.c.b16 %v87, %v86
  %v91 = vpack.c.b16 %v89, %v88
  %92 = vrot.lane.b32.xlu0 %v90, 120
  %v93 = vpop.permute.xlu0 %92
  %94 = vrot.lane.b32.xlu0 %v91, 120
  %v95 = vpop.permute.xlu0 %94
  %v98 = vunpack.c.l.b16 %v75
  %v99 = vunpack.c.h.b16 %v75
  %v100 = vunpack.c.l.b16 %v81
  %v101 = vunpack.c.h.b16 %v81
  %v102 = vpack.c.b16 %v98, %v98
  %v103 = vpack.c.b16 %v99, %v99
  %v104 = vpack.c.b16 %v100, %v100
  %v105 = vpack.c.b16 %v101, %v101
  %106 = vrot.lane.b32.xlu0 %v102, 127
  %v107 = vpop.permute.xlu0 %106
  %108 = vrot.lane.b32.xlu0 %v103, 127
  %v109 = vpop.permute.xlu0 %108
  %110 = vrot.lane.b32.xlu0 %v104, 127
  %v111 = vpop.permute.xlu0 %110
  %112 = vrot.lane.b32.xlu0 %v105, 127
  %v113 = vpop.permute.xlu0 %112
  %vm114 = vcmask 1039360
  %v115 = vsel %vm114, %v107, %v109
  %v116 = vsel %vm114, %v109, %v111
  %v117 = vsel %vm114, %v111, %v113
  %vm118 = vcmask 64512
  %v120 = vsel %vm118, %v93, 0
  %v123 = vsel %vm118, %v95, 0
  %vm125 = vcmask 1043456
  %v127 = vsel %vm125, %v115, 0
  %v130 = vsel %vm125, %v116, 0
  %v133 = vsel %vm125, %v117, 0
  %135 = vmatprep.subr.bf16.mxu0 %v130
  %136 = vmatpush1.bf16.msra.mxu0 %v127
  %137 = vmatprep.subr.bf16.mxu0 0
  %138 = vmatpush1.bf16.msra.mxu0 0
  %139 = vmatprep.subr.bf16.mxu0 0
  %140 = vmatpush1.bf16.msra.mxu0 0
  %141 = vmatprep.subr.bf16.mxu0 0
  %142 = vmatpush1.bf16.msra.mxu0 0
  %143 = vmatprep.subr.bf16.mxu0 0
  %144 = vmatpush1.bf16.msra.mxu0 0
  %145 = vmatprep.subr.bf16.mxu0 0
  %146 = vmatpush1.bf16.msra.mxu0 0
  %147 = vmatprep.subr.bf16.mxu0 0
  %148 = vmatpush1.bf16.msra.mxu0 0
  %149 = vmatprep.subr.bf16.mxu0 0
  %150 = vmatpush1.bf16.msra.mxu0 0
  %151 = vmatprep.subr.bf16.mxu0 0
  %152 = vmatpush1.bf16.msra.mxu0 0
  %153 = vmatprep.subr.bf16.mxu0 0
  %154 = vmatpush1.bf16.msra.mxu0 0
  %155 = vmatprep.subr.bf16.mxu0 0
  %156 = vmatpush1.bf16.msra.mxu0 0
  %157 = vmatprep.subr.bf16.mxu0 0
  %158 = vmatpush1.bf16.msra.mxu0 0
  %159 = vmatprep.subr.bf16.mxu0 0
  %160 = vmatpush1.bf16.msra.mxu0 0
  %161 = vmatprep.subr.bf16.mxu0 0
  %162 = vmatpush1.bf16.msra.mxu0 0
  %163 = vmatprep.subr.bf16.mxu0 0
  %164 = vmatpush1.bf16.msra.mxu0 0
  %165 = vmatprep.subr.bf16.mxu0 0
  %166 = vmatpush1.bf16.msra.mxu0 0
  %167 = vmatprep.mubr.bf16.mxu0 0
  %168 = vmatmul.mubr.bf16.gmra.mrb[0].mxu0 %v120
  %v169 = vpop.f32.mrb[0].mxu0
  %v170 = vadd.f32 0.0, %v169
  %v171 = vpop.f32.mrb[0].mxu0
  %v172 = vadd.f32 0.0, %v171
  %v173 = vpop.f32.mrb[0].mxu0
  %v174 = vadd.f32 0.0, %v173
  %v175 = vpop.f32.mrb[0].mxu0
  %v176 = vadd.f32 0.0, %v175
  %177 = vmatprep.mubr.bf16.mxu0 0
  %178 = vmatmul.mubr.bf16.gmra.mrb[0].mxu0 %v123
  %v179 = vpop.f32.mrb[0].mxu0
  %v180 = vadd.f32 0.0, %v179
  %v181 = vpop.f32.mrb[0].mxu0
  %v182 = vadd.f32 0.0, %v181
  %v183 = vpop.f32.mrb[0].mxu0
  %v184 = vadd.f32 0.0, %v183
  %v185 = vpop.f32.mrb[0].mxu0
  %v186 = vadd.f32 0.0, %v185
  %187 = vdwg.mxu0
  %188 = vmatprep.subr.bf16.mxu0 0
  %189 = vmatpush1.bf16.msra.mxu0 %v133
  %190 = vmatprep.subr.bf16.mxu0 0
  %191 = vmatpush1.bf16.msra.mxu0 0
  %192 = vmatprep.subr.bf16.mxu0 0
  %193 = vmatpush1.bf16.msra.mxu0 0
  %194 = vmatprep.subr.bf16.mxu0 0
  %195 = vmatpush1.bf16.msra.mxu0 0
  %196 = vmatprep.subr.bf16.mxu0 0
  %197 = vmatpush1.bf16.msra.mxu0 0
  %198 = vmatprep.subr.bf16.mxu0 0
  %199 = vmatpush1.bf16.msra.mxu0 0
  %200 = vmatprep.subr.bf16.mxu0 0
  %201 = vmatpush1.bf16.msra.mxu0 0
  %202 = vmatprep.subr.bf16.mxu0 0
  %203 = vmatpush1.bf16.msra.mxu0 0
  %204 = vmatprep.subr.bf16.mxu0 0
  %205 = vmatpush1.bf16.msra.mxu0 0
  %206 = vmatprep.subr.bf16.mxu0 0
  %207 = vmatpush1.bf16.msra.mxu0 0
  %208 = vmatprep.subr.bf16.mxu0 0
  %209 = vmatpush1.bf16.msra.mxu0 0
  %210 = vmatprep.subr.bf16.mxu0 0
  %211 = vmatpush1.bf16.msra.mxu0 0
  %212 = vmatprep.subr.bf16.mxu0 0
  %213 = vmatpush1.bf16.msra.mxu0 0
  %214 = vmatprep.subr.bf16.mxu0 0
  %215 = vmatpush1.bf16.msra.mxu0 0
  %216 = vmatprep.subr.bf16.mxu0 0
  %217 = vmatpush1.bf16.msra.mxu0 0
  %218 = vmatprep.subr.bf16.mxu0 0
  %219 = vmatpush1.bf16.msra.mxu0 0
  %220 = vmatprep.mubr.bf16.mxu0 0
  %221 = vmatmul.mubr.bf16.gmra.mrb[0].mxu0 %v120
  %v222 = vpop.f32.mrb[0].mxu0
  %v223 = vadd.f32 0.0, %v222
  %v224 = vpop.f32.mrb[0].mxu0
  %v225 = vpop.f32.mrb[0].mxu0
  %v226 = vadd.f32 0.0, %v225
  %v227 = vpop.f32.mrb[0].mxu0
  %228 = vmatprep.mubr.bf16.mxu0 0
  %229 = vmatmul.mubr.bf16.gmra.mrb[0].mxu0 %v123
  %v230 = vpop.f32.mrb[0].mxu0
  %v231 = vadd.f32 0.0, %v230
  %v232 = vpop.f32.mrb[0].mxu0
  %v233 = vpop.f32.mrb[0].mxu0
  %v234 = vadd.f32 0.0, %v233
  %v235 = vpop.f32.mrb[0].mxu0
  %236 = vdwg.mxu0
  %v238 = vunpack.c.l.b16 %v76
  %v239 = vpack.c.b16 %v238, %v238
  %v241 = vsel %vm118, %v90, 0
  %v244 = vsel %vm118, %v91, 0
  %v247 = vsel %vm125, %v102, 0
  %v250 = vsel %vm125, %v103, 0
  %v253 = vsel %vm125, %v239, 0
  %255 = vmatprep.subr.bf16.mxu0 %v250
  %256 = vmatpush1.bf16.msra.mxu0 %v247
  %257 = vmatprep.subr.bf16.mxu0 0
  %258 = vmatpush1.bf16.msra.mxu0 0
  %259 = vmatprep.subr.bf16.mxu0 0
  %260 = vmatpush1.bf16.msra.mxu0 0
  %261 = vmatprep.subr.bf16.mxu0 0
  %262 = vmatpush1.bf16.msra.mxu0 0
  %263 = vmatprep.subr.bf16.mxu0 0
  %264 = vmatpush1.bf16.msra.mxu0 0
  %265 = vmatprep.subr.bf16.mxu0 0
  %266 = vmatpush1.bf16.msra.mxu0 0
  %267 = vmatprep.subr.bf16.mxu0 0
  %268 = vmatpush1.bf16.msra.mxu0 0
  %269 = vmatprep.subr.bf16.mxu0 0
  %270 = vmatpush1.bf16.msra.mxu0 0
  %271 = vmatprep.subr.bf16.mxu0 0
  %272 = vmatpush1.bf16.msra.mxu0 0
  %273 = vmatprep.subr.bf16.mxu0 0
  %274 = vmatpush1.bf16.msra.mxu0 0
  %275 = vmatprep.subr.bf16.mxu0 0
  %276 = vmatpush1.bf16.msra.mxu0 0
  %277 = vmatprep.subr.bf16.mxu0 0
  %278 = vmatpush1.bf16.msra.mxu0 0
  %279 = vmatprep.subr.bf16.mxu0 0
  %280 = vmatpush1.bf16.msra.mxu0 0
  %281 = vmatprep.subr.bf16.mxu0 0
  %282 = vmatpush1.bf16.msra.mxu0 0
  %283 = vmatprep.subr.bf16.mxu0 0
  %284 = vmatpush1.bf16.msra.mxu0 0
  %285 = vmatprep.subr.bf16.mxu0 0
  %286 = vmatpush1.bf16.msra.mxu0 0
  %287 = vmatprep.mubr.bf16.mxu0 0
  %288 = vmatmul.mubr.bf16.gmra.mrb[0].mxu0 %v241
  %v289 = vpop.f32.mrb[0].mxu0
  %v290 = vadd.f32 %v170, %v289
  %v291 = vpop.f32.mrb[0].mxu0
  %v292 = vadd.f32 %v172, %v291
  %v293 = vpop.f32.mrb[0].mxu0
  %v294 = vadd.f32 %v174, %v293
  %v295 = vpop.f32.mrb[0].mxu0
  %v296 = vadd.f32 %v176, %v295
  %297 = vmatprep.mubr.bf16.mxu0 0
  %298 = vmatmul.mubr.bf16.gmra.mrb[0].mxu0 %v244
  %v299 = vpop.f32.mrb[0].mxu0
  %v300 = vadd.f32 %v180, %v299
  %v301 = vpop.f32.mrb[0].mxu0
  %v302 = vadd.f32 %v182, %v301
  %v303 = vpop.f32.mrb[0].mxu0
  %v304 = vadd.f32 %v184, %v303
  %v305 = vpop.f32.mrb[0].mxu0
  %v306 = vadd.f32 %v186, %v305
  %307 = vdwg.mxu0
  %308 = vmatprep.subr.bf16.mxu0 0
  %309 = vmatpush1.bf16.msra.mxu0 %v253
  %310 = vmatprep.subr.bf16.mxu0 0
  %311 = vmatpush1.bf16.msra.mxu0 0
  %312 = vmatprep.subr.bf16.mxu0 0
  %313 = vmatpush1.bf16.msra.mxu0 0
  %314 = vmatprep.subr.bf16.mxu0 0
  %315 = vmatpush1.bf16.msra.mxu0 0
  %316 = vmatprep.subr.bf16.mxu0 0
  %317 = vmatpush1.bf16.msra.mxu0 0
  %318 = vmatprep.subr.bf16.mxu0 0
  %319 = vmatpush1.bf16.msra.mxu0 0
  %320 = vmatprep.subr.bf16.mxu0 0
  %321 = vmatpush1.bf16.msra.mxu0 0
  %322 = vmatprep.subr.bf16.mxu0 0
  %323 = vmatpush1.bf16.msra.mxu0 0
  %324 = vmatprep.subr.bf16.mxu0 0
  %325 = vmatpush1.bf16.msra.mxu0 0
  %326 = vmatprep.subr.bf16.mxu0 0
  %327 = vmatpush1.bf16.msra.mxu0 0
  %328 = vmatprep.subr.bf16.mxu0 0
  %329 = vmatpush1.bf16.msra.mxu0 0
  %330 = vmatprep.subr.bf16.mxu0 0
  %331 = vmatpush1.bf16.msra.mxu0 0
  %332 = vmatprep.subr.bf16.mxu0 0
  %333 = vmatpush1.bf16.msra.mxu0 0
  %334 = vmatprep.subr.bf16.mxu0 0
  %335 = vmatpush1.bf16.msra.mxu0 0
  %336 = vmatprep.subr.bf16.mxu0 0
  %337 = vmatpush1.bf16.msra.mxu0 0
  %338 = vmatprep.subr.bf16.mxu0 0
  %339 = vmatpush1.bf16.msra.mxu0 0
  %340 = vmatprep.mubr.bf16.mxu0 0
  %341 = vmatmul.mubr.bf16.gmra.mrb[0].mxu0 %v241
  %v342 = vpop.f32.mrb[0].mxu0
  %v343 = vadd.f32 %v223, %v342
  %v344 = vpop.f32.mrb[0].mxu0
  %v345 = vpop.f32.mrb[0].mxu0
  %v346 = vadd.f32 %v226, %v345
  %v347 = vpop.f32.mrb[0].mxu0
  %348 = vmatprep.mubr.bf16.mxu0 0
  %349 = vmatmul.mubr.bf16.gmra.mrb[0].mxu0 %v244
  %v350 = vpop.f32.mrb[0].mxu0
  %v351 = vadd.f32 %v231, %v350
  %v352 = vpop.f32.mrb[0].mxu0
  %v353 = vpop.f32.mrb[0].mxu0
  %v354 = vadd.f32 %v234, %v353
  %v355 = vpop.f32.mrb[0].mxu0
  %356 = vdwg.mxu0
  %357 = vrot.lane.b32.xlu0 %v90, 112
  %v358 = vpop.permute.xlu0 %357
  %359 = vrot.lane.b32.xlu0 %v91, 112
  %v360 = vpop.permute.xlu0 %359
  %361 = vrot.lane.b32.xlu0 %v102, 111
  %v362 = vpop.permute.xlu0 %361
  %363 = vrot.lane.b32.xlu0 %v103, 111
  %v364 = vpop.permute.xlu0 %363
  %365 = vrot.lane.b32.xlu0 %v104, 111
  %v366 = vpop.permute.xlu0 %365
  %367 = vrot.lane.b32.xlu0 %v105, 111
  %v368 = vpop.permute.xlu0 %367
  %vm369 = vcmask 908288
  %v370 = vsel %vm369, %v362, %v364
  %v371 = vsel %vm369, %v364, %v366
  %v372 = vsel %vm369, %v366, %v368
  %v374 = vsel %vm118, %v358, 0
  %v377 = vsel %vm118, %v360, 0
  %v380 = vsel %vm125, %v370, 0
  %v383 = vsel %vm125, %v371, 0
  %v386 = vsel %vm125, %v372, 0
  %388 = vmatprep.subr.bf16.mxu0 %v383
  %389 = vmatpush1.bf16.msra.mxu0 %v380
  %390 = vmatprep.subr.bf16.mxu0 0
  %391 = vmatpush1.bf16.msra.mxu0 0
  %392 = vmatprep.subr.bf16.mxu0 0
  %393 = vmatpush1.bf16.msra.mxu0 0
  %394 = vmatprep.subr.bf16.mxu0 0
  %395 = vmatpush1.bf16.msra.mxu0 0
  %396 = vmatprep.subr.bf16.mxu0 0
  %397 = vmatpush1.bf16.msra.mxu0 0
  %398 = vmatprep.subr.bf16.mxu0 0
  %399 = vmatpush1.bf16.msra.mxu0 0
  %400 = vmatprep.subr.bf16.mxu0 0
  %401 = vmatpush1.bf16.msra.mxu0 0
  %402 = vmatprep.subr.bf16.mxu0 0
  %403 = vmatpush1.bf16.msra.mxu0 0
  %404 = vmatprep.subr.bf16.mxu0 0
  %405 = vmatpush1.bf16.msra.mxu0 0
  %406 = vmatprep.subr.bf16.mxu0 0
  %407 = vmatpush1.bf16.msra.mxu0 0
  %408 = vmatprep.subr.bf16.mxu0 0
  %409 = vmatpush1.bf16.msra.mxu0 0
  %410 = vmatprep.subr.bf16.mxu0 0
  %411 = vmatpush1.bf16.msra.mxu0 0
  %412 = vmatprep.subr.bf16.mxu0 0
  %413 = vmatpush1.bf16.msra.mxu0 0
  %414 = vmatprep.subr.bf16.mxu0 0
  %415 = vmatpush1.bf16.msra.mxu0 0
  %416 = vmatprep.subr.bf16.mxu0 0
  %417 = vmatpush1.bf16.msra.mxu0 0
  %418 = vmatprep.subr.bf16.mxu0 0
  %419 = vmatpush1.bf16.msra.mxu0 0
  %420 = vmatprep.mubr.bf16.mxu0 0
  %421 = vmatmul.mubr.bf16.gmra.mrb[0].mxu0 %v374
  %v422 = vpop.f32.mrb[0].mxu0
  %v423 = vadd.f32 0.0, %v422
  %v424 = vpop.f32.mrb[0].mxu0
  %v425 = vadd.f32 0.0, %v424
  %v426 = vpop.f32.mrb[0].mxu0
  %v427 = vadd.f32 0.0, %v426
  %v428 = vpop.f32.mrb[0].mxu0
  %v429 = vadd.f32 0.0, %v428
  %430 = vmatprep.mubr.bf16.mxu0 0
  %431 = vmatmul.mubr.bf16.gmra.mrb[0].mxu0 %v377
  %v432 = vpop.f32.mrb[0].mxu0
  %v433 = vadd.f32 0.0, %v432
  %v434 = vpop.f32.mrb[0].mxu0
  %v435 = vadd.f32 0.0, %v434
  %v436 = vpop.f32.mrb[0].mxu0
  %v437 = vadd.f32 0.0, %v436
  %v438 = vpop.f32.mrb[0].mxu0
  %v439 = vadd.f32 0.0, %v438
  %440 = vdwg.mxu0
  %441 = vmatprep.subr.bf16.mxu0 0
  %442 = vmatpush1.bf16.msra.mxu0 %v386
  %443 = vmatprep.subr.bf16.mxu0 0
  %444 = vmatpush1.bf16.msra.mxu0 0
  %445 = vmatprep.subr.bf16.mxu0 0
  %446 = vmatpush1.bf16.msra.mxu0 0
  %447 = vmatprep.subr.bf16.mxu0 0
  %448 = vmatpush1.bf16.msra.mxu0 0
  %449 = vmatprep.subr.bf16.mxu0 0
  %450 = vmatpush1.bf16.msra.mxu0 0
  %451 = vmatprep.subr.bf16.mxu0 0
  %452 = vmatpush1.bf16.msra.mxu0 0
  %453 = vmatprep.subr.bf16.mxu0 0
  %454 = vmatpush1.bf16.msra.mxu0 0
  %455 = vmatprep.subr.bf16.mxu0 0
  %456 = vmatpush1.bf16.msra.mxu0 0
  %457 = vmatprep.subr.bf16.mxu0 0
  %458 = vmatpush1.bf16.msra.mxu0 0
  %459 = vmatprep.subr.bf16.mxu0 0
  %460 = vmatpush1.bf16.msra.mxu0 0
  %461 = vmatprep.subr.bf16.mxu0 0
  %462 = vmatpush1.bf16.msra.mxu0 0
  %463 = vmatprep.subr.bf16.mxu0 0
  %464 = vmatpush1.bf16.msra.mxu0 0
  %465 = vmatprep.subr.bf16.mxu0 0
  %466 = vmatpush1.bf16.msra.mxu0 0
  %467 = vmatprep.subr.bf16.mxu0 0
  %468 = vmatpush1.bf16.msra.mxu0 0
  %469 = vmatprep.subr.bf16.mxu0 0
  %470 = vmatpush1.bf16.msra.mxu0 0
  %471 = vmatprep.subr.bf16.mxu0 0
  %472 = vmatpush1.bf16.msra.mxu0 0
  %473 = vmatprep.mubr.bf16.mxu0 0
  %474 = vmatmul.mubr.bf16.gmra.mrb[0].mxu0 %v374
  %v475 = vpop.f32.mrb[0].mxu0
  %v476 = vadd.f32 0.0, %v475
  %v477 = vpop.f32.mrb[0].mxu0
  %v478 = vpop.f32.mrb[0].mxu0
  %v479 = vadd.f32 0.0, %v478
  %v480 = vpop.f32.mrb[0].mxu0
  %481 = vmatprep.mubr.bf16.mxu0 0
  %482 = vmatmul.mubr.bf16.gmra.mrb[0].mxu0 %v377
  %v483 = vpop.f32.mrb[0].mxu0
  %v484 = vadd.f32 0.0, %v483
  %v485 = vpop.f32.mrb[0].mxu0
  %v486 = vpop.f32.mrb[0].mxu0
  %v487 = vadd.f32 0.0, %v486
  %v488 = vpop.f32.mrb[0].mxu0
  %489 = vdwg.mxu0
  %v490 = vadd.f32 %v290, %v423
  %v491 = vadd.f32 %v292, %v425
  %v492 = vadd.f32 %v343, %v476
  %v493 = vadd.f32 %v294, %v427
  %v494 = vadd.f32 %v296, %v429
  %v495 = vadd.f32 %v346, %v479
  %v496 = vadd.f32 %v300, %v433
  %v497 = vadd.f32 %v302, %v435
  %v498 = vadd.f32 %v351, %v484
  %v499 = vadd.f32 %v304, %v437
  %v500 = vadd.f32 %v306, %v439
  %v501 = vadd.f32 %v354, %v487
  %502 = vrot.lane.b32.xlu0 %v90, 104
  %v503 = vpop.permute.xlu0 %502
  %504 = vrot.lane.b32.xlu0 %v91, 104
  %v505 = vpop.permute.xlu0 %504
  %506 = vrot.lane.b32.xlu0 %v102, 110
  %v507 = vpop.permute.xlu0 %506
  %508 = vrot.lane.b32.xlu0 %v103, 110
  %v509 = vpop.permute.xlu0 %508
  %510 = vrot.lane.b32.xlu0 %v104, 110
  %v511 = vpop.permute.xlu0 %510
  %512 = vrot.lane.b32.xlu0 %v105, 110
  %v513 = vpop.permute.xlu0 %512
  %vm514 = vcmask 900096
  %v515 = vsel %vm514, %v507, %v509
  %v516 = vsel %vm514, %v509, %v511
  %v517 = vsel %vm514, %v511, %v513
  %v519 = vsel %vm118, %v503, 0
  %v522 = vsel %vm118, %v505, 0
  %v525 = vsel %vm125, %v515, 0
  %v528 = vsel %vm125, %v516, 0
  %v531 = vsel %vm125, %v517, 0
  %533 = vmatprep.subr.bf16.mxu0 %v528
  %534 = vmatpush1.bf16.msra.mxu0 %v525
  %535 = vmatprep.subr.bf16.mxu0 0
  %536 = vmatpush1.bf16.msra.mxu0 0
  %537 = vmatprep.subr.bf16.mxu0 0
  %538 = vmatpush1.bf16.msra.mxu0 0
  %539 = vmatprep.subr.bf16.mxu0 0
  %540 = vmatpush1.bf16.msra.mxu0 0
  %541 = vmatprep.subr.bf16.mxu0 0
  %542 = vmatpush1.bf16.msra.mxu0 0
  %543 = vmatprep.subr.bf16.mxu0 0
  %544 = vmatpush1.bf16.msra.mxu0 0
  %545 = vmatprep.subr.bf16.mxu0 0
  %546 = vmatpush1.bf16.msra.mxu0 0
  %547 = vmatprep.subr.bf16.mxu0 0
  %548 = vmatpush1.bf16.msra.mxu0 0
  %549 = vmatprep.subr.bf16.mxu0 0
  %550 = vmatpush1.bf16.msra.mxu0 0
  %551 = vmatprep.subr.bf16.mxu0 0
  %552 = vmatpush1.bf16.msra.mxu0 0
  %553 = vmatprep.subr.bf16.mxu0 0
  %554 = vmatpush1.bf16.msra.mxu0 0
  %555 = vmatprep.subr.bf16.mxu0 0
  %556 = vmatpush1.bf16.msra.mxu0 0
  %557 = vmatprep.subr.bf16.mxu0 0
  %558 = vmatpush1.bf16.msra.mxu0 0
  %559 = vmatprep.subr.bf16.mxu0 0
  %560 = vmatpush1.bf16.msra.mxu0 0
  %561 = vmatprep.subr.bf16.mxu0 0
  %562 = vmatpush1.bf16.msra.mxu0 0
  %563 = vmatprep.subr.bf16.mxu0 0
  %564 = vmatpush1.bf16.msra.mxu0 0
  %565 = vmatprep.mubr.bf16.mxu0 0
  %566 = vmatmul.mubr.bf16.gmra.mrb[0].mxu0 %v519
  %v567 = vpop.f32.mrb[0].mxu0
  %v568 = vadd.f32 0.0, %v567
  %v569 = vpop.f32.mrb[0].mxu0
  %v570 = vadd.f32 0.0, %v569
  %v571 = vpop.f32.mrb[0].mxu0
  %v572 = vadd.f32 0.0, %v571
  %v573 = vpop.f32.mrb[0].mxu0
  %v574 = vadd.f32 0.0, %v573
  %575 = vmatprep.mubr.bf16.mxu0 0
  %576 = vmatmul.mubr.bf16.gmra.mrb[0].mxu0 %v522
  %v577 = vpop.f32.mrb[0].mxu0
  %v578 = vadd.f32 0.0, %v577
  %v579 = vpop.f32.mrb[0].mxu0
  %v580 = vadd.f32 0.0, %v579
  %v581 = vpop.f32.mrb[0].mxu0
  %v582 = vadd.f32 0.0, %v581
  %v583 = vpop.f32.mrb[0].mxu0
  %v584 = vadd.f32 0.0, %v583
  %585 = vdwg.mxu0
  %586 = vmatprep.subr.bf16.mxu0 0
  %587 = vmatpush1.bf16.msra.mxu0 %v531
  %588 = vmatprep.subr.bf16.mxu0 0
  %589 = vmatpush1.bf16.msra.mxu0 0
  %590 = vmatprep.subr.bf16.mxu0 0
  %591 = vmatpush1.bf16.msra.mxu0 0
  %592 = vmatprep.subr.bf16.mxu0 0
  %593 = vmatpush1.bf16.msra.mxu0 0
  %594 = vmatprep.subr.bf16.mxu0 0
  %595 = vmatpush1.bf16.msra.mxu0 0
  %596 = vmatprep.subr.bf16.mxu0 0
  %597 = vmatpush1.bf16.msra.mxu0 0
  %598 = vmatprep.subr.bf16.mxu0 0
  %599 = vmatpush1.bf16.msra.mxu0 0
  %600 = vmatprep.subr.bf16.mxu0 0
  %601 = vmatpush1.bf16.msra.mxu0 0
  %602 = vmatprep.subr.bf16.mxu0 0
  %603 = vmatpush1.bf16.msra.mxu0 0
  %604 = vmatprep.subr.bf16.mxu0 0
  %605 = vmatpush1.bf16.msra.mxu0 0
  %606 = vmatprep.subr.bf16.mxu0 0
  %607 = vmatpush1.bf16.msra.mxu0 0
  %608 = vmatprep.subr.bf16.mxu0 0
  %609 = vmatpush1.bf16.msra.mxu0 0
  %610 = vmatprep.subr.bf16.mxu0 0
  %611 = vmatpush1.bf16.msra.mxu0 0
  %612 = vmatprep.subr.bf16.mxu0 0
  %613 = vmatpush1.bf16.msra.mxu0 0
  %614 = vmatprep.subr.bf16.mxu0 0
  %615 = vmatpush1.bf16.msra.mxu0 0
  %616 = vmatprep.subr.bf16.mxu0 0
  %617 = vmatpush1.bf16.msra.mxu0 0
  %618 = vmatprep.mubr.bf16.mxu0 0
  %619 = vmatmul.mubr.bf16.gmra.mrb[0].mxu0 %v519
  %v620 = vpop.f32.mrb[0].mxu0
  %v621 = vadd.f32 0.0, %v620
  %v622 = vpop.f32.mrb[0].mxu0
  %v623 = vpop.f32.mrb[0].mxu0
  %v624 = vadd.f32 0.0, %v623
  %v625 = vpop.f32.mrb[0].mxu0
  %626 = vmatprep.mubr.bf16.mxu0 0
  %627 = vmatmul.mubr.bf16.gmra.mrb[0].mxu0 %v522
  %v628 = vpop.f32.mrb[0].mxu0
  %v629 = vadd.f32 0.0, %v628
  %v630 = vpop.f32.mrb[0].mxu0
  %v631 = vpop.f32.mrb[0].mxu0
  %v632 = vadd.f32 0.0, %v631
  %v633 = vpop.f32.mrb[0].mxu0
  %634 = vdwg.mxu0
  %v635 = vadd.f32 %v490, %v568
  %v636 = vadd.f32 %v491, %v570
  %v637 = vadd.f32 %v492, %v621
  %v638 = vadd.f32 %v493, %v572
  %v639 = vadd.f32 %v494, %v574
  %v640 = vadd.f32 %v495, %v624
  %v641 = vadd.f32 %v496, %v578
  %v642 = vadd.f32 %v497, %v580
  %v643 = vadd.f32 %v498, %v629
  %v644 = vadd.f32 %v499, %v582
  %v645 = vadd.f32 %v500, %v584
  %v646 = vadd.f32 %v501, %v632
  %v647 = vpack.c.bf16 %v638, %v635
  %v648 = vpack.c.bf16 %v639, %v636
  %v649 = vpack.c.bf16 %v640, %v637
  %v650 = vpack.c.bf16 %v644, %v641
  %v651 = vpack.c.bf16 %v645, %v642
  %v652 = vpack.c.bf16 %v646, %v643
  %v659 = vunpack.c.l.b16 %v647
  %v660 = vunpack.c.l.b16 %v648
  %v661 = vunpack.c.l.b16 %v649
  %v662 = vunpack.c.h.b16 %v647
  %v663 = vunpack.c.h.b16 %v648
  %v664 = vunpack.c.h.b16 %v649
  %v665 = vunpack.c.l.b16 %v650
  %v666 = vunpack.c.l.b16 %v651
  %v667 = vunpack.c.l.b16 %v652
  %v668 = vunpack.c.h.b16 %v650
  %v669 = vunpack.c.h.b16 %v651
  %v670 = vunpack.c.h.b16 %v652
  %v671 = vpack.c.b16 %v660, %v659
  %v672 = vpack.c.b16 %v661, %v661
  %v673 = vpack.c.b16 %v663, %v662
  %v674 = vpack.c.b16 %v664, %v664
  %v675 = vpack.c.b16 %v666, %v665
  %v676 = vpack.c.b16 %v667, %v667
  %v677 = vpack.c.b16 %v669, %v668
  %v678 = vpack.c.b16 %v670, %v670
  %687 = vst [vmem:[%s2] sm:$0xff] %v671
  %688 = vst [vmem:[%s2 + $0x8] sm:$0xf] %v672
  %689 = vst [vmem:[%s2 + $0xc] sm:$0xff] %v673
  %690 = vst [vmem:[%s2 + $0x14] sm:$0xf] %v674
  %691 = vst [vmem:[%s2 + $0x18] sm:$0xff] %v675
  %692 = vst [vmem:[%s2 + $0x20] sm:$0xf] %v676
  %693 = vst [vmem:[%s2 + $0x24] sm:$0xff] %v677
  %694 = vst [vmem:[%s2 + $0x2c] sm:$0xf] %v678
  %v695 = vsel %vm72, 1, 0
  %v696 = vsel %vm73, 1, 0
  %v697 = vsel %vm74, 1, 0
  %vm698 = vcmp.eq.s32.totalorder %v695, 1
  %vm699 = vcmp.eq.s32.totalorder %v696, 1
  %vm700 = vcmp.eq.s32.totalorder %v697, 1
  %v701 = vsel %vm698, %v635, 0.0
  %v702 = vsel %vm699, %v636, 0.0
  %v703 = vsel %vm700, %v637, 0.0
  %v704 = vsel %vm698, %v638, 0.0
  %v705 = vsel %vm699, %v639, 0.0
  %v706 = vsel %vm700, %v640, 0.0
  %v707 = vsel %vm698, %v641, 0.0
  %v708 = vsel %vm699, %v642, 0.0
  %v709 = vsel %vm700, %v643, 0.0
  %v710 = vsel %vm698, %v644, 0.0
  %v711 = vsel %vm699, %v645, 0.0
  %v712 = vsel %vm700, %v646, 0.0
  %v713 = vadd.f32 %v701, %v702
  %v714 = vadd.f32 %v713, %v703
  %715 = vadd.xlane.f32.xlu0 %v714
  %v716 = vpop.xlane.xlu0 %715
  %v717 = vadd.f32 %v704, %v705
  %v718 = vadd.f32 %v717, %v706
  %719 = vadd.xlane.f32.xlu0 %v718
  %v720 = vpop.xlane.xlu0 %719
  %v721 = vadd.f32 %v707, %v708
  %v722 = vadd.f32 %v721, %v709
  %723 = vadd.xlane.f32.xlu0 %v722
  %v724 = vpop.xlane.xlu0 %723
  %v725 = vadd.f32 %v710, %v711
  %v726 = vadd.f32 %v725, %v712
  %727 = vadd.xlane.f32.xlu0 %v726
  %v728 = vpop.xlane.xlu0 %727
  %v729 = vmul.f32 %v716, 0.00390625
  %v730 = vmul.f32 %v720, 0.00390625
  %v731 = vmul.f32 %v724, 0.00390625
  %v732 = vmul.f32 %v728, 0.00390625
  %v733 = vsub.f32 %v635, %v729
  %v734 = vsub.f32 %v636, %v729
  %v735 = vsub.f32 %v637, %v729
  %v736 = vsub.f32 %v638, %v730
  %v737 = vsub.f32 %v639, %v730
  %v738 = vsub.f32 %v640, %v730
  %v739 = vsub.f32 %v641, %v731
  %v740 = vsub.f32 %v642, %v731
  %v741 = vsub.f32 %v643, %v731
  %v742 = vsub.f32 %v644, %v732
  %v743 = vsub.f32 %v645, %v732
  %v744 = vsub.f32 %v646, %v732
  %v745 = vmul.f32 %v733, %v733
  %v746 = vmul.f32 %v734, %v734
  %v747 = vmul.f32 %v735, %v735
  %v748 = vmul.f32 %v736, %v736
  %v749 = vmul.f32 %v737, %v737
  %v750 = vmul.f32 %v738, %v738
  %v751 = vmul.f32 %v739, %v739
  %v752 = vmul.f32 %v740, %v740
  %v753 = vmul.f32 %v741, %v741
  %v754 = vmul.f32 %v742, %v742
  %v755 = vmul.f32 %v743, %v743
  %v756 = vmul.f32 %v744, %v744
  %v757 = vsel %vm698, %v745, 0.0
  %v758 = vsel %vm699, %v746, 0.0
  %v759 = vsel %vm700, %v747, 0.0
  %v760 = vsel %vm698, %v748, 0.0
  %v761 = vsel %vm699, %v749, 0.0
  %v762 = vsel %vm700, %v750, 0.0
  %v763 = vsel %vm698, %v751, 0.0
  %v764 = vsel %vm699, %v752, 0.0
  %v765 = vsel %vm700, %v753, 0.0
  %v766 = vsel %vm698, %v754, 0.0
  %v767 = vsel %vm699, %v755, 0.0
  %v768 = vsel %vm700, %v756, 0.0
  %v769 = vadd.f32 %v757, %v758
  %v770 = vadd.f32 %v769, %v759
  %771 = vadd.xlane.f32.xlu0 %v770
  %v772 = vpop.xlane.xlu0 %771
  %v773 = vadd.f32 %v760, %v761
  %v774 = vadd.f32 %v773, %v762
  %775 = vadd.xlane.f32.xlu0 %v774
  %v776 = vpop.xlane.xlu0 %775
  %v777 = vadd.f32 %v763, %v764
  %v778 = vadd.f32 %v777, %v765
  %779 = vadd.xlane.f32.xlu0 %v778
  %v780 = vpop.xlane.xlu0 %779
  %v781 = vadd.f32 %v766, %v767
  %v782 = vadd.f32 %v781, %v768
  %783 = vadd.xlane.f32.xlu0 %v782
  %v784 = vpop.xlane.xlu0 %783
  %vm785 = vcmask 7168
  %v786 = vsel %vm785, %v716, %v772
  %v787 = vsel %vm785, %v720, %v776
  %v788 = vsel %vm785, %v724, %v780
  %v789 = vsel %vm785, %v728, %v784
  %vm790 = vcmask 15360
  %791 = vst.msk [vmem:[%s3] sm:$0xff] %vm790, %v786
  %792 = vst.msk [vmem:[%s3 + $0x8] sm:$0xff] %vm790, %v787
  %793 = vst.msk [vmem:[%s3 + $0x10] sm:$0xff] %vm790, %v788
  %794 = vst.msk [vmem:[%s3 + $0x18] sm:$0xff] %vm790, %v789
  %s795 = scalar_lea.vmem %s0, 16
  %v796 = vld [vmem:[%s795] sm:$0xff]
  %v797 = vld [vmem:[%s795 + $0x8] sm:$0xf]
  %v798 = vld [vmem:[%s1] sm:$0xf]
  %v799 = vld [vmem:[%s1 + $0x4] sm:$0xf]
  %v800 = vld [vmem:[%s1 + $0x8] sm:$0xf]
  %v801 = vld [vmem:[%s1 + $0xc] sm:$0xf]
  %v802 = vld [vmem:[%s795 + $0x8] sm:$0xff]
  %v807 = vunpack.c.l.b16 %v798
  %v808 = vunpack.c.l.b16 %v799
  %v809 = vunpack.c.l.b16 %v800
  %v810 = vunpack.c.l.b16 %v801
  %v811 = vpack.c.b16 %v808, %v807
  %v812 = vpack.c.b16 %v810, %v809
  %813 = vrot.lane.b32.xlu0 %v811, 120
  %v814 = vpop.permute.xlu0 %813
  %815 = vrot.lane.b32.xlu0 %v812, 120
  %v816 = vpop.permute.xlu0 %815
  %v819 = vunpack.c.l.b16 %v796
  %v820 = vunpack.c.h.b16 %v796
  %v821 = vunpack.c.l.b16 %v802
  %v822 = vunpack.c.h.b16 %v802
  %v823 = vpack.c.b16 %v819, %v819
  %v824 = vpack.c.b16 %v820, %v820
  %v825 = vpack.c.b16 %v821, %v821
  %v826 = vpack.c.b16 %v822, %v822
  %827 = vrot.lane.b32.xlu0 %v823, 127
  %v828 = vpop.permute.xlu0 %827
  %829 = vrot.lane.b32.xlu0 %v824, 127
  %v830 = vpop.permute.xlu0 %829
  %831 = vrot.lane.b32.xlu0 %v825, 127
  %v832 = vpop.permute.xlu0 %831
  %833 = vrot.lane.b32.xlu0 %v826, 127
  %v834 = vpop.permute.xlu0 %833
  %v835 = vsel %vm114, %v828, %v830
  %v836 = vsel %vm114, %v830, %v832
  %v837 = vsel %vm114, %v832, %v834
  %v839 = vsel %vm118, %v814, 0
  %v842 = vsel %vm118, %v816, 0
  %v845 = vsel %vm125, %v835, 0
  %v848 = vsel %vm125, %v836, 0
  %v851 = vsel %vm125, %v837, 0
  %853 = vmatprep.subr.bf16.mxu0 %v848
  %854 = vmatpush1.bf16.msra.mxu0 %v845
  %855 = vmatprep.subr.bf16.mxu0 0
  %856 = vmatpush1.bf16.msra.mxu0 0
  %857 = vmatprep.subr.bf16.mxu0 0
  %858 = vmatpush1.bf16.msra.mxu0 0
  %859 = vmatprep.subr.bf16.mxu0 0
  %860 = vmatpush1.bf16.msra.mxu0 0
  %861 = vmatprep.subr.bf16.mxu0 0
  %862 = vmatpush1.bf16.msra.mxu0 0
  %863 = vmatprep.subr.bf16.mxu0 0
  %864 = vmatpush1.bf16.msra.mxu0 0
  %865 = vmatprep.subr.bf16.mxu0 0
  %866 = vmatpush1.bf16.msra.mxu0 0
  %867 = vmatprep.subr.bf16.mxu0 0
  %868 = vmatpush1.bf16.msra.mxu0 0
  %869 = vmatprep.subr.bf16.mxu0 0
  %870 = vmatpush1.bf16.msra.mxu0 0
  %871 = vmatprep.subr.bf16.mxu0 0
  %872 = vmatpush1.bf16.msra.mxu0 0
  %873 = vmatprep.subr.bf16.mxu0 0
  %874 = vmatpush1.bf16.msra.mxu0 0
  %875 = vmatprep.subr.bf16.mxu0 0
  %876 = vmatpush1.bf16.msra.mxu0 0
  %877 = vmatprep.subr.bf16.mxu0 0
  %878 = vmatpush1.bf16.msra.mxu0 0
  %879 = vmatprep.subr.bf16.mxu0 0
  %880 = vmatpush1.bf16.msra.mxu0 0
  %881 = vmatprep.subr.bf16.mxu0 0
  %882 = vmatpush1.bf16.msra.mxu0 0
  %883 = vmatprep.subr.bf16.mxu0 0
  %884 = vmatpush1.bf16.msra.mxu0 0
  %885 = vmatprep.mubr.bf16.mxu0 0
  %886 = vmatmul.mubr.bf16.gmra.mrb[0].mxu0 %v839
  %v887 = vpop.f32.mrb[0].mxu0
  %v888 = vadd.f32 0.0, %v887
  %v889 = vpop.f32.mrb[0].mxu0
  %v890 = vadd.f32 0.0, %v889
  %v891 = vpop.f32.mrb[0].mxu0
  %v892 = vadd.f32 0.0, %v891
  %v893 = vpop.f32.mrb[0].mxu0
  %v894 = vadd.f32 0.0, %v893
  %895 = vmatprep.mubr.bf16.mxu0 0
  %896 = vmatmul.mubr.bf16.gmra.mrb[0].mxu0 %v842
  %v897 = vpop.f32.mrb[0].mxu0
  %v898 = vadd.f32 0.0, %v897
  %v899 = vpop.f32.mrb[0].mxu0
  %v900 = vadd.f32 0.0, %v899
  %v901 = vpop.f32.mrb[0].mxu0
  %v902 = vadd.f32 0.0, %v901
  %v903 = vpop.f32.mrb[0].mxu0
  %v904 = vadd.f32 0.0, %v903
  %905 = vdwg.mxu0
  %906 = vmatprep.subr.bf16.mxu0 0
  %907 = vmatpush1.bf16.msra.mxu0 %v851
  %908 = vmatprep.subr.bf16.mxu0 0
  %909 = vmatpush1.bf16.msra.mxu0 0
  %910 = vmatprep.subr.bf16.mxu0 0
  %911 = vmatpush1.bf16.msra.mxu0 0
  %912 = vmatprep.subr.bf16.mxu0 0
  %913 = vmatpush1.bf16.msra.mxu0 0
  %914 = vmatprep.subr.bf16.mxu0 0
  %915 = vmatpush1.bf16.msra.mxu0 0
  %916 = vmatprep.subr.bf16.mxu0 0
  %917 = vmatpush1.bf16.msra.mxu0 0
  %918 = vmatprep.subr.bf16.mxu0 0
  %919 = vmatpush1.bf16.msra.mxu0 0
  %920 = vmatprep.subr.bf16.mxu0 0
  %921 = vmatpush1.bf16.msra.mxu0 0
  %922 = vmatprep.subr.bf16.mxu0 0
  %923 = vmatpush1.bf16.msra.mxu0 0
  %924 = vmatprep.subr.bf16.mxu0 0
  %925 = vmatpush1.bf16.msra.mxu0 0
  %926 = vmatprep.subr.bf16.mxu0 0
  %927 = vmatpush1.bf16.msra.mxu0 0
  %928 = vmatprep.subr.bf16.mxu0 0
  %929 = vmatpush1.bf16.msra.mxu0 0
  %930 = vmatprep.subr.bf16.mxu0 0
  %931 = vmatpush1.bf16.msra.mxu0 0
  %932 = vmatprep.subr.bf16.mxu0 0
  %933 = vmatpush1.bf16.msra.mxu0 0
  %934 = vmatprep.subr.bf16.mxu0 0
  %935 = vmatpush1.bf16.msra.mxu0 0
  %936 = vmatprep.subr.bf16.mxu0 0
  %937 = vmatpush1.bf16.msra.mxu0 0
  %938 = vmatprep.mubr.bf16.mxu0 0
  %939 = vmatmul.mubr.bf16.gmra.mrb[0].mxu0 %v839
  %v940 = vpop.f32.mrb[0].mxu0
  %v941 = vadd.f32 0.0, %v940
  %v942 = vpop.f32.mrb[0].mxu0
  %v943 = vpop.f32.mrb[0].mxu0
  %v944 = vadd.f32 0.0, %v943
  %v945 = vpop.f32.mrb[0].mxu0
  %946 = vmatprep.mubr.bf16.mxu0 0
  %947 = vmatmul.mubr.bf16.gmra.mrb[0].mxu0 %v842
  %v948 = vpop.f32.mrb[0].mxu0
  %v949 = vadd.f32 0.0, %v948
  %v950 = vpop.f32.mrb[0].mxu0
  %v951 = vpop.f32.mrb[0].mxu0
  %v952 = vadd.f32 0.0, %v951
  %v953 = vpop.f32.mrb[0].mxu0
  %954 = vdwg.mxu0
  %v956 = vunpack.c.l.b16 %v797
  %v957 = vpack.c.b16 %v956, %v956
  %v959 = vsel %vm118, %v811, 0
  %v962 = vsel %vm118, %v812, 0
  %v965 = vsel %vm125, %v823, 0
  %v968 = vsel %vm125, %v824, 0
  %v971 = vsel %vm125, %v957, 0
  %973 = vmatprep.subr.bf16.mxu0 %v968
  %974 = vmatpush1.bf16.msra.mxu0 %v965
  %975 = vmatprep.subr.bf16.mxu0 0
  %976 = vmatpush1.bf16.msra.mxu0 0
  %977 = vmatprep.subr.bf16.mxu0 0
  %978 = vmatpush1.bf16.msra.mxu0 0
  %979 = vmatprep.subr.bf16.mxu0 0
  %980 = vmatpush1.bf16.msra.mxu0 0
  %981 = vmatprep.subr.bf16.mxu0 0
  %982 = vmatpush1.bf16.msra.mxu0 0
  %983 = vmatprep.subr.bf16.mxu0 0
  %984 = vmatpush1.bf16.msra.mxu0 0
  %985 = vmatprep.subr.bf16.mxu0 0
  %986 = vmatpush1.bf16.msra.mxu0 0
  %987 = vmatprep.subr.bf16.mxu0 0
  %988 = vmatpush1.bf16.msra.mxu0 0
  %989 = vmatprep.subr.bf16.mxu0 0
  %990 = vmatpush1.bf16.msra.mxu0 0
  %991 = vmatprep.subr.bf16.mxu0 0
  %992 = vmatpush1.bf16.msra.mxu0 0
  %993 = vmatprep.subr.bf16.mxu0 0
  %994 = vmatpush1.bf16.msra.mxu0 0
  %995 = vmatprep.subr.bf16.mxu0 0
  %996 = vmatpush1.bf16.msra.mxu0 0
  %997 = vmatprep.subr.bf16.mxu0 0
  %998 = vmatpush1.bf16.msra.mxu0 0
  %999 = vmatprep.subr.bf16.mxu0 0
  %1000 = vmatpush1.bf16.msra.mxu0 0
  %1001 = vmatprep.subr.bf16.mxu0 0
  %1002 = vmatpush1.bf16.msra.mxu0 0
  %1003 = vmatprep.subr.bf16.mxu0 0
  %1004 = vmatpush1.bf16.msra.mxu0 0
  %1005 = vmatprep.mubr.bf16.mxu0 0
  %1006 = vmatmul.mubr.bf16.gmra.mrb[0].mxu0 %v959
  %v1007 = vpop.f32.mrb[0].mxu0
  %v1008 = vadd.f32 %v888, %v1007
  %v1009 = vpop.f32.mrb[0].mxu0
  %v1010 = vadd.f32 %v890, %v1009
  %v1011 = vpop.f32.mrb[0].mxu0
  %v1012 = vadd.f32 %v892, %v1011
  %v1013 = vpop.f32.mrb[0].mxu0
  %v1014 = vadd.f32 %v894, %v1013
  %1015 = vmatprep.mubr.bf16.mxu0 0
  %1016 = vmatmul.mubr.bf16.gmra.mrb[0].mxu0 %v962
  %v1017 = vpop.f32.mrb[0].mxu0
  %v1018 = vadd.f32 %v898, %v1017
  %v1019 = vpop.f32.mrb[0].mxu0
  %v1020 = vadd.f32 %v900, %v1019
  %v1021 = vpop.f32.mrb[0].mxu0
  %v1022 = vadd.f32 %v902, %v1021
  %v1023 = vpop.f32.mrb[0].mxu0
  %v1024 = vadd.f32 %v904, %v1023
  %1025 = vdwg.mxu0
  %1026 = vmatprep.subr.bf16.mxu0 0
  %1027 = vmatpush1.bf16.msra.mxu0 %v971
  %1028 = vmatprep.subr.bf16.mxu0 0
  %1029 = vmatpush1.bf16.msra.mxu0 0
  %1030 = vmatprep.subr.bf16.mxu0 0
  %1031 = vmatpush1.bf16.msra.mxu0 0
  %1032 = vmatprep.subr.bf16.mxu0 0
  %1033 = vmatpush1.bf16.msra.mxu0 0
  %1034 = vmatprep.subr.bf16.mxu0 0
  %1035 = vmatpush1.bf16.msra.mxu0 0
  %1036 = vmatprep.subr.bf16.mxu0 0
  %1037 = vmatpush1.bf16.msra.mxu0 0
  %1038 = vmatprep.subr.bf16.mxu0 0
  %1039 = vmatpush1.bf16.msra.mxu0 0
  %1040 = vmatprep.subr.bf16.mxu0 0
  %1041 = vmatpush1.bf16.msra.mxu0 0
  %1042 = vmatprep.subr.bf16.mxu0 0
  %1043 = vmatpush1.bf16.msra.mxu0 0
  %1044 = vmatprep.subr.bf16.mxu0 0
  %1045 = vmatpush1.bf16.msra.mxu0 0
  %1046 = vmatprep.subr.bf16.mxu0 0
  %1047 = vmatpush1.bf16.msra.mxu0 0
  %1048 = vmatprep.subr.bf16.mxu0 0
  %1049 = vmatpush1.bf16.msra.mxu0 0
  %1050 = vmatprep.subr.bf16.mxu0 0
  %1051 = vmatpush1.bf16.msra.mxu0 0
  %1052 = vmatprep.subr.bf16.mxu0 0
  %1053 = vmatpush1.bf16.msra.mxu0 0
  %1054 = vmatprep.subr.bf16.mxu0 0
  %1055 = vmatpush1.bf16.msra.mxu0 0
  %1056 = vmatprep.subr.bf16.mxu0 0
  %1057 = vmatpush1.bf16.msra.mxu0 0
  %1058 = vmatprep.mubr.bf16.mxu0 0
  %1059 = vmatmul.mubr.bf16.gmra.mrb[0].mxu0 %v959
  %v1060 = vpop.f32.mrb[0].mxu0
  %v1061 = vadd.f32 %v941, %v1060
  %v1062 = vpop.f32.mrb[0].mxu0
  %v1063 = vpop.f32.mrb[0].mxu0
  %v1064 = vadd.f32 %v944, %v1063
  %v1065 = vpop.f32.mrb[0].mxu0
  %1066 = vmatprep.mubr.bf16.mxu0 0
  %1067 = vmatmul.mubr.bf16.gmra.mrb[0].mxu0 %v962
  %v1068 = vpop.f32.mrb[0].mxu0
  %v1069 = vadd.f32 %v949, %v1068
  %v1070 = vpop.f32.mrb[0].mxu0
  %v1071 = vpop.f32.mrb[0].mxu0
  %v1072 = vadd.f32 %v952, %v1071
  %v1073 = vpop.f32.mrb[0].mxu0
  %1074 = vdwg.mxu0
  %1075 = vrot.lane.b32.xlu0 %v811, 112
  %v1076 = vpop.permute.xlu0 %1075
  %1077 = vrot.lane.b32.xlu0 %v812, 112
  %v1078 = vpop.permute.xlu0 %1077
  %1079 = vrot.lane.b32.xlu0 %v823, 111
  %v1080 = vpop.permute.xlu0 %1079
  %1081 = vrot.lane.b32.xlu0 %v824, 111
  %v1082 = vpop.permute.xlu0 %1081
  %1083 = vrot.lane.b32.xlu0 %v825, 111
  %v1084 = vpop.permute.xlu0 %1083
  %1085 = vrot.lane.b32.xlu0 %v826, 111
  %v1086 = vpop.permute.xlu0 %1085
  %v1087 = vsel %vm369, %v1080, %v1082
  %v1088 = vsel %vm369, %v1082, %v1084
  %v1089 = vsel %vm369, %v1084, %v1086
  %v1091 = vsel %vm118, %v1076, 0
  %v1094 = vsel %vm118, %v1078, 0
  %v1097 = vsel %vm125, %v1087, 0
  %v1100 = vsel %vm125, %v1088, 0
  %v1103 = vsel %vm125, %v1089, 0
  %1105 = vmatprep.subr.bf16.mxu0 %v1100
  %1106 = vmatpush1.bf16.msra.mxu0 %v1097
  %1107 = vmatprep.subr.bf16.mxu0 0
  %1108 = vmatpush1.bf16.msra.mxu0 0
  %1109 = vmatprep.subr.bf16.mxu0 0
  %1110 = vmatpush1.bf16.msra.mxu0 0
  %1111 = vmatprep.subr.bf16.mxu0 0
  %1112 = vmatpush1.bf16.msra.mxu0 0
  %1113 = vmatprep.subr.bf16.mxu0 0
  %1114 = vmatpush1.bf16.msra.mxu0 0
  %1115 = vmatprep.subr.bf16.mxu0 0
  %1116 = vmatpush1.bf16.msra.mxu0 0
  %1117 = vmatprep.subr.bf16.mxu0 0
  %1118 = vmatpush1.bf16.msra.mxu0 0
  %1119 = vmatprep.subr.bf16.mxu0 0
  %1120 = vmatpush1.bf16.msra.mxu0 0
  %1121 = vmatprep.subr.bf16.mxu0 0
  %1122 = vmatpush1.bf16.msra.mxu0 0
  %1123 = vmatprep.subr.bf16.mxu0 0
  %1124 = vmatpush1.bf16.msra.mxu0 0
  %1125 = vmatprep.subr.bf16.mxu0 0
  %1126 = vmatpush1.bf16.msra.mxu0 0
  %1127 = vmatprep.subr.bf16.mxu0 0
  %1128 = vmatpush1.bf16.msra.mxu0 0
  %1129 = vmatprep.subr.bf16.mxu0 0
  %1130 = vmatpush1.bf16.msra.mxu0 0
  %1131 = vmatprep.subr.bf16.mxu0 0
  %1132 = vmatpush1.bf16.msra.mxu0 0
  %1133 = vmatprep.subr.bf16.mxu0 0
  %1134 = vmatpush1.bf16.msra.mxu0 0
  %1135 = vmatprep.subr.bf16.mxu0 0
  %1136 = vmatpush1.bf16.msra.mxu0 0
  %1137 = vmatprep.mubr.bf16.mxu0 0
  %1138 = vmatmul.mubr.bf16.gmra.mrb[0].mxu0 %v1091
  %v1139 = vpop.f32.mrb[0].mxu0
  %v1140 = vadd.f32 0.0, %v1139
  %v1141 = vpop.f32.mrb[0].mxu0
  %v1142 = vadd.f32 0.0, %v1141
  %v1143 = vpop.f32.mrb[0].mxu0
  %v1144 = vadd.f32 0.0, %v1143
  %v1145 = vpop.f32.mrb[0].mxu0
  %v1146 = vadd.f32 0.0, %v1145
  %1147 = vmatprep.mubr.bf16.mxu0 0
  %1148 = vmatmul.mubr.bf16.gmra.mrb[0].mxu0 %v1094
  %v1149 = vpop.f32.mrb[0].mxu0
  %v1150 = vadd.f32 0.0, %v1149
  %v1151 = vpop.f32.mrb[0].mxu0
  %v1152 = vadd.f32 0.0, %v1151
  %v1153 = vpop.f32.mrb[0].mxu0
  %v1154 = vadd.f32 0.0, %v1153
  %v1155 = vpop.f32.mrb[0].mxu0
  %v1156 = vadd.f32 0.0, %v1155
  %1157 = vdwg.mxu0
  %1158 = vmatprep.subr.bf16.mxu0 0
  %1159 = vmatpush1.bf16.msra.mxu0 %v1103
  %1160 = vmatprep.subr.bf16.mxu0 0
  %1161 = vmatpush1.bf16.msra.mxu0 0
  %1162 = vmatprep.subr.bf16.mxu0 0
  %1163 = vmatpush1.bf16.msra.mxu0 0
  %1164 = vmatprep.subr.bf16.mxu0 0
  %1165 = vmatpush1.bf16.msra.mxu0 0
  %1166 = vmatprep.subr.bf16.mxu0 0
  %1167 = vmatpush1.bf16.msra.mxu0 0
  %1168 = vmatprep.subr.bf16.mxu0 0
  %1169 = vmatpush1.bf16.msra.mxu0 0
  %1170 = vmatprep.subr.bf16.mxu0 0
  %1171 = vmatpush1.bf16.msra.mxu0 0
  %1172 = vmatprep.subr.bf16.mxu0 0
  %1173 = vmatpush1.bf16.msra.mxu0 0
  %1174 = vmatprep.subr.bf16.mxu0 0
  %1175 = vmatpush1.bf16.msra.mxu0 0
  %1176 = vmatprep.subr.bf16.mxu0 0
  %1177 = vmatpush1.bf16.msra.mxu0 0
  %1178 = vmatprep.subr.bf16.mxu0 0
  %1179 = vmatpush1.bf16.msra.mxu0 0
  %1180 = vmatprep.subr.bf16.mxu0 0
  %1181 = vmatpush1.bf16.msra.mxu0 0
  %1182 = vmatprep.subr.bf16.mxu0 0
  %1183 = vmatpush1.bf16.msra.mxu0 0
  %1184 = vmatprep.subr.bf16.mxu0 0
  %1185 = vmatpush1.bf16.msra.mxu0 0
  %1186 = vmatprep.subr.bf16.mxu0 0
  %1187 = vmatpush1.bf16.msra.mxu0 0
  %1188 = vmatprep.subr.bf16.mxu0 0
  %1189 = vmatpush1.bf16.msra.mxu0 0
  %1190 = vmatprep.mubr.bf16.mxu0 0
  %1191 = vmatmul.mubr.bf16.gmra.mrb[0].mxu0 %v1091
  %v1192 = vpop.f32.mrb[0].mxu0
  %v1193 = vadd.f32 0.0, %v1192
  %v1194 = vpop.f32.mrb[0].mxu0
  %v1195 = vpop.f32.mrb[0].mxu0
  %v1196 = vadd.f32 0.0, %v1195
  %v1197 = vpop.f32.mrb[0].mxu0
  %1198 = vmatprep.mubr.bf16.mxu0 0
  %1199 = vmatmul.mubr.bf16.gmra.mrb[0].mxu0 %v1094
  %v1200 = vpop.f32.mrb[0].mxu0
  %v1201 = vadd.f32 0.0, %v1200
  %v1202 = vpop.f32.mrb[0].mxu0
  %v1203 = vpop.f32.mrb[0].mxu0
  %v1204 = vadd.f32 0.0, %v1203
  %v1205 = vpop.f32.mrb[0].mxu0
  %1206 = vdwg.mxu0
  %v1207 = vadd.f32 %v1008, %v1140
  %v1208 = vadd.f32 %v1010, %v1142
  %v1209 = vadd.f32 %v1061, %v1193
  %v1210 = vadd.f32 %v1012, %v1144
  %v1211 = vadd.f32 %v1014, %v1146
  %v1212 = vadd.f32 %v1064, %v1196
  %v1213 = vadd.f32 %v1018, %v1150
  %v1214 = vadd.f32 %v1020, %v1152
  %v1215 = vadd.f32 %v1069, %v1201
  %v1216 = vadd.f32 %v1022, %v1154
  %v1217 = vadd.f32 %v1024, %v1156
  %v1218 = vadd.f32 %v1072, %v1204
  %1219 = vrot.lane.b32.xlu0 %v811, 104
  %v1220 = vpop.permute.xlu0 %1219
  %1221 = vrot.lane.b32.xlu0 %v812, 104
  %v1222 = vpop.permute.xlu0 %1221
  %1223 = vrot.lane.b32.xlu0 %v823, 110
  %v1224 = vpop.permute.xlu0 %1223
  %1225 = vrot.lane.b32.xlu0 %v824, 110
  %v1226 = vpop.permute.xlu0 %1225
  %1227 = vrot.lane.b32.xlu0 %v825, 110
  %v1228 = vpop.permute.xlu0 %1227
  %1229 = vrot.lane.b32.xlu0 %v826, 110
  %v1230 = vpop.permute.xlu0 %1229
  %v1231 = vsel %vm514, %v1224, %v1226
  %v1232 = vsel %vm514, %v1226, %v1228
  %v1233 = vsel %vm514, %v1228, %v1230
  %v1235 = vsel %vm118, %v1220, 0
  %v1238 = vsel %vm118, %v1222, 0
  %v1241 = vsel %vm125, %v1231, 0
  %v1244 = vsel %vm125, %v1232, 0
  %v1247 = vsel %vm125, %v1233, 0
  %1249 = vmatprep.subr.bf16.mxu0 %v1244
  %1250 = vmatpush1.bf16.msra.mxu0 %v1241
  %1251 = vmatprep.subr.bf16.mxu0 0
  %1252 = vmatpush1.bf16.msra.mxu0 0
  %1253 = vmatprep.subr.bf16.mxu0 0
  %1254 = vmatpush1.bf16.msra.mxu0 0
  %1255 = vmatprep.subr.bf16.mxu0 0
  %1256 = vmatpush1.bf16.msra.mxu0 0
  %1257 = vmatprep.subr.bf16.mxu0 0
  %1258 = vmatpush1.bf16.msra.mxu0 0
  %1259 = vmatprep.subr.bf16.mxu0 0
  %1260 = vmatpush1.bf16.msra.mxu0 0
  %1261 = vmatprep.subr.bf16.mxu0 0
  %1262 = vmatpush1.bf16.msra.mxu0 0
  %1263 = vmatprep.subr.bf16.mxu0 0
  %1264 = vmatpush1.bf16.msra.mxu0 0
  %1265 = vmatprep.subr.bf16.mxu0 0
  %1266 = vmatpush1.bf16.msra.mxu0 0
  %1267 = vmatprep.subr.bf16.mxu0 0
  %1268 = vmatpush1.bf16.msra.mxu0 0
  %1269 = vmatprep.subr.bf16.mxu0 0
  %1270 = vmatpush1.bf16.msra.mxu0 0
  %1271 = vmatprep.subr.bf16.mxu0 0
  %1272 = vmatpush1.bf16.msra.mxu0 0
  %1273 = vmatprep.subr.bf16.mxu0 0
  %1274 = vmatpush1.bf16.msra.mxu0 0
  %1275 = vmatprep.subr.bf16.mxu0 0
  %1276 = vmatpush1.bf16.msra.mxu0 0
  %1277 = vmatprep.subr.bf16.mxu0 0
  %1278 = vmatpush1.bf16.msra.mxu0 0
  %1279 = vmatprep.subr.bf16.mxu0 0
  %1280 = vmatpush1.bf16.msra.mxu0 0
  %1281 = vmatprep.mubr.bf16.mxu0 0
  %1282 = vmatmul.mubr.bf16.gmra.mrb[0].mxu0 %v1235
  %v1283 = vpop.f32.mrb[0].mxu0
  %v1284 = vadd.f32 0.0, %v1283
  %v1285 = vpop.f32.mrb[0].mxu0
  %v1286 = vadd.f32 0.0, %v1285
  %v1287 = vpop.f32.mrb[0].mxu0
  %v1288 = vadd.f32 0.0, %v1287
  %v1289 = vpop.f32.mrb[0].mxu0
  %v1290 = vadd.f32 0.0, %v1289
  %1291 = vmatprep.mubr.bf16.mxu0 0
  %1292 = vmatmul.mubr.bf16.gmra.mrb[0].mxu0 %v1238
  %v1293 = vpop.f32.mrb[0].mxu0
  %v1294 = vadd.f32 0.0, %v1293
  %v1295 = vpop.f32.mrb[0].mxu0
  %v1296 = vadd.f32 0.0, %v1295
  %v1297 = vpop.f32.mrb[0].mxu0
  %v1298 = vadd.f32 0.0, %v1297
  %v1299 = vpop.f32.mrb[0].mxu0
  %v1300 = vadd.f32 0.0, %v1299
  %1301 = vdwg.mxu0
  %1302 = vmatprep.subr.bf16.mxu0 0
  %1303 = vmatpush1.bf16.msra.mxu0 %v1247
  %1304 = vmatprep.subr.bf16.mxu0 0
  %1305 = vmatpush1.bf16.msra.mxu0 0
  %1306 = vmatprep.subr.bf16.mxu0 0
  %1307 = vmatpush1.bf16.msra.mxu0 0
  %1308 = vmatprep.subr.bf16.mxu0 0
  %1309 = vmatpush1.bf16.msra.mxu0 0
  %1310 = vmatprep.subr.bf16.mxu0 0
  %1311 = vmatpush1.bf16.msra.mxu0 0
  %1312 = vmatprep.subr.bf16.mxu0 0
  %1313 = vmatpush1.bf16.msra.mxu0 0
  %1314 = vmatprep.subr.bf16.mxu0 0
  %1315 = vmatpush1.bf16.msra.mxu0 0
  %1316 = vmatprep.subr.bf16.mxu0 0
  %1317 = vmatpush1.bf16.msra.mxu0 0
  %1318 = vmatprep.subr.bf16.mxu0 0
  %1319 = vmatpush1.bf16.msra.mxu0 0
  %1320 = vmatprep.subr.bf16.mxu0 0
  %1321 = vmatpush1.bf16.msra.mxu0 0
  %1322 = vmatprep.subr.bf16.mxu0 0
  %1323 = vmatpush1.bf16.msra.mxu0 0
  %1324 = vmatprep.subr.bf16.mxu0 0
  %1325 = vmatpush1.bf16.msra.mxu0 0
  %1326 = vmatprep.subr.bf16.mxu0 0
  %1327 = vmatpush1.bf16.msra.mxu0 0
  %1328 = vmatprep.subr.bf16.mxu0 0
  %1329 = vmatpush1.bf16.msra.mxu0 0
  %1330 = vmatprep.subr.bf16.mxu0 0
  %1331 = vmatpush1.bf16.msra.mxu0 0
  %1332 = vmatprep.subr.bf16.mxu0 0
  %1333 = vmatpush1.bf16.msra.mxu0 0
  %1334 = vmatprep.mubr.bf16.mxu0 0
  %1335 = vmatmul.mubr.bf16.gmra.mrb[0].mxu0 %v1235
  %v1336 = vpop.f32.mrb[0].mxu0
  %v1337 = vadd.f32 0.0, %v1336
  %v1338 = vpop.f32.mrb[0].mxu0
  %v1339 = vpop.f32.mrb[0].mxu0
  %v1340 = vadd.f32 0.0, %v1339
  %v1341 = vpop.f32.mrb[0].mxu0
  %1342 = vmatprep.mubr.bf16.mxu0 0
  %1343 = vmatmul.mubr.bf16.gmra.mrb[0].mxu0 %v1238
  %v1344 = vpop.f32.mrb[0].mxu0
  %v1345 = vadd.f32 0.0, %v1344
  %v1346 = vpop.f32.mrb[0].mxu0
  %v1347 = vpop.f32.mrb[0].mxu0
  %v1348 = vadd.f32 0.0, %v1347
  %v1349 = vpop.f32.mrb[0].mxu0
  %1350 = vdwg.mxu0
  %v1351 = vadd.f32 %v1207, %v1284
  %v1352 = vadd.f32 %v1208, %v1286
  %v1353 = vadd.f32 %v1209, %v1337
  %v1354 = vadd.f32 %v1210, %v1288
  %v1355 = vadd.f32 %v1211, %v1290
  %v1356 = vadd.f32 %v1212, %v1340
  %v1357 = vadd.f32 %v1213, %v1294
  %v1358 = vadd.f32 %v1214, %v1296
  %v1359 = vadd.f32 %v1215, %v1345
  %v1360 = vadd.f32 %v1216, %v1298
  %v1361 = vadd.f32 %v1217, %v1300
  %v1362 = vadd.f32 %v1218, %v1348
  %v1363 = vpack.c.bf16 %v1354, %v1351
  %v1364 = vpack.c.bf16 %v1355, %v1352
  %v1365 = vpack.c.bf16 %v1356, %v1353
  %v1366 = vpack.c.bf16 %v1360, %v1357
  %v1367 = vpack.c.bf16 %v1361, %v1358
  %v1368 = vpack.c.bf16 %v1362, %v1359
  %v1375 = vunpack.c.l.b16 %v1363
  %v1376 = vunpack.c.l.b16 %v1364
  %v1377 = vunpack.c.l.b16 %v1365
  %v1378 = vunpack.c.h.b16 %v1363
  %v1379 = vunpack.c.h.b16 %v1364
  %v1380 = vunpack.c.h.b16 %v1365
  %v1381 = vunpack.c.l.b16 %v1366
  %v1382 = vunpack.c.l.b16 %v1367
  %v1383 = vunpack.c.l.b16 %v1368
  %v1384 = vunpack.c.h.b16 %v1366
  %v1385 = vunpack.c.h.b16 %v1367
  %v1386 = vunpack.c.h.b16 %v1368
  %v1387 = vpack.c.b16 %v1376, %v1375
  %v1388 = vpack.c.b16 %v1377, %v1377
  %v1389 = vpack.c.b16 %v1379, %v1378
  %v1390 = vpack.c.b16 %v1380, %v1380
  %v1391 = vpack.c.b16 %v1382, %v1381
  %v1392 = vpack.c.b16 %v1383, %v1383
  %v1393 = vpack.c.b16 %v1385, %v1384
  %v1394 = vpack.c.b16 %v1386, %v1386
  %s1403 = scalar_lea.vmem %s2, 48
  %1404 = vst [vmem:[%s1403] sm:$0xff] %v1387
  %1405 = vst [vmem:[%s1403 + $0x8] sm:$0xf] %v1388
  %1406 = vst [vmem:[%s1403 + $0xc] sm:$0xff] %v1389
  %1407 = vst [vmem:[%s1403 + $0x14] sm:$0xf] %v1390
  %1408 = vst [vmem:[%s1403 + $0x18] sm:$0xff] %v1391
  %1409 = vst [vmem:[%s1403 + $0x20] sm:$0xf] %v1392
  %1410 = vst [vmem:[%s1403 + $0x24] sm:$0xff] %v1393
  %1411 = vst [vmem:[%s1403 + $0x2c] sm:$0xf] %v1394
  %v1412 = vsel %vm698, %v1351, 0.0
  %v1413 = vsel %vm699, %v1352, 0.0
  %v1414 = vsel %vm700, %v1353, 0.0
  %v1415 = vsel %vm698, %v1354, 0.0
  %v1416 = vsel %vm699, %v1355, 0.0
  %v1417 = vsel %vm700, %v1356, 0.0
  %v1418 = vsel %vm698, %v1357, 0.0
  %v1419 = vsel %vm699, %v1358, 0.0
  %v1420 = vsel %vm700, %v1359, 0.0
  %v1421 = vsel %vm698, %v1360, 0.0
  %v1422 = vsel %vm699, %v1361, 0.0
  %v1423 = vsel %vm700, %v1362, 0.0
  %v1424 = vadd.f32 %v1412, %v1413
  %v1425 = vadd.f32 %v1424, %v1414
  %1426 = vadd.xlane.f32.xlu0 %v1425
  %v1427 = vpop.xlane.xlu0 %1426
  %v1428 = vadd.f32 %v1415, %v1416
  %v1429 = vadd.f32 %v1428, %v1417
  %1430 = vadd.xlane.f32.xlu0 %v1429
  %v1431 = vpop.xlane.xlu0 %1430
  %v1432 = vadd.f32 %v1418, %v1419
  %v1433 = vadd.f32 %v1432, %v1420
  %1434 = vadd.xlane.f32.xlu0 %v1433
  %v1435 = vpop.xlane.xlu0 %1434
  %v1436 = vadd.f32 %v1421, %v1422
  %v1437 = vadd.f32 %v1436, %v1423
  %1438 = vadd.xlane.f32.xlu0 %v1437
  %v1439 = vpop.xlane.xlu0 %1438
  %v1440 = vmul.f32 %v1427, 0.00390625
  %v1441 = vmul.f32 %v1431, 0.00390625
  %v1442 = vmul.f32 %v1435, 0.00390625
  %v1443 = vmul.f32 %v1439, 0.00390625
  %v1444 = vsub.f32 %v1351, %v1440
  %v1445 = vsub.f32 %v1352, %v1440
  %v1446 = vsub.f32 %v1353, %v1440
  %v1447 = vsub.f32 %v1354, %v1441
  %v1448 = vsub.f32 %v1355, %v1441
  %v1449 = vsub.f32 %v1356, %v1441
  %v1450 = vsub.f32 %v1357, %v1442
  %v1451 = vsub.f32 %v1358, %v1442
  %v1452 = vsub.f32 %v1359, %v1442
  %v1453 = vsub.f32 %v1360, %v1443
  %v1454 = vsub.f32 %v1361, %v1443
  %v1455 = vsub.f32 %v1362, %v1443
  %v1456 = vmul.f32 %v1444, %v1444
  %v1457 = vmul.f32 %v1445, %v1445
  %v1458 = vmul.f32 %v1446, %v1446
  %v1459 = vmul.f32 %v1447, %v1447
  %v1460 = vmul.f32 %v1448, %v1448
  %v1461 = vmul.f32 %v1449, %v1449
  %v1462 = vmul.f32 %v1450, %v1450
  %v1463 = vmul.f32 %v1451, %v1451
  %v1464 = vmul.f32 %v1452, %v1452
  %v1465 = vmul.f32 %v1453, %v1453
  %v1466 = vmul.f32 %v1454, %v1454
  %v1467 = vmul.f32 %v1455, %v1455
  %v1468 = vsel %vm698, %v1456, 0.0
  %v1469 = vsel %vm699, %v1457, 0.0
  %v1470 = vsel %vm700, %v1458, 0.0
  %v1471 = vsel %vm698, %v1459, 0.0
  %v1472 = vsel %vm699, %v1460, 0.0
  %v1473 = vsel %vm700, %v1461, 0.0
  %v1474 = vsel %vm698, %v1462, 0.0
  %v1475 = vsel %vm699, %v1463, 0.0
  %v1476 = vsel %vm700, %v1464, 0.0
  %v1477 = vsel %vm698, %v1465, 0.0
  %v1478 = vsel %vm699, %v1466, 0.0
  %v1479 = vsel %vm700, %v1467, 0.0
  %v1480 = vadd.f32 %v1468, %v1469
  %v1481 = vadd.f32 %v1480, %v1470
  %1482 = vadd.xlane.f32.xlu0 %v1481
  %v1483 = vpop.xlane.xlu0 %1482
  %v1484 = vadd.f32 %v1471, %v1472
  %v1485 = vadd.f32 %v1484, %v1473
  %1486 = vadd.xlane.f32.xlu0 %v1485
  %v1487 = vpop.xlane.xlu0 %1486
  %v1488 = vadd.f32 %v1474, %v1475
  %v1489 = vadd.f32 %v1488, %v1476
  %1490 = vadd.xlane.f32.xlu0 %v1489
  %v1491 = vpop.xlane.xlu0 %1490
  %v1492 = vadd.f32 %v1477, %v1478
  %v1493 = vadd.f32 %v1492, %v1479
  %1494 = vadd.xlane.f32.xlu0 %v1493
  %v1495 = vpop.xlane.xlu0 %1494
  %v1496 = vsel %vm785, %v1427, %v1483
  %v1497 = vsel %vm785, %v1431, %v1487
  %v1498 = vsel %vm785, %v1435, %v1491
  %v1499 = vsel %vm785, %v1439, %v1495
  %s1500 = scalar_lea.vmem %s3, 32
  %1501 = vst.msk [vmem:[%s1500] sm:$0xff] %vm790, %v1496
  %1502 = vst.msk [vmem:[%s1500 + $0x8] sm:$0xff] %vm790, %v1497
  %1503 = vst.msk [vmem:[%s1500 + $0x10] sm:$0xff] %vm790, %v1498
  %1504 = vst.msk [vmem:[%s1500 + $0x18] sm:$0xff] %vm790, %v1499
  // Predicated region
  $region10: #{conv_trans_block.1} parent=0 // pred_check
    _
  $region11: #{conv_trans_block.1} parent=0 // pred_check_branch
    %1506 = sbr.rel (0) target = $region13
  $region12: #{conv_trans_block.1} parent=0 // pred_region
    _
  $region13: #{conv_trans_block.1} parent=0 // pred_fallthru
    _
  // Predicated region
  $region14: #{conv_trans_block.1} parent=0 // pred_check
    _
  $region15: #{conv_trans_block.1} parent=0 // pred_check_branch
    %1508 = sbr.rel (0) target = $region17
  $region16: #{conv_trans_block.1} parent=0 // pred_region
    _
  $region17: #{conv_trans_block.1} parent=0 // pred_fallthru
    _
  // Predicated region
  $region18: #{conv_trans_block.1} parent=0 // pred_check
    _
  $region19: #{conv_trans_block.1} parent=0 // pred_check_branch
    %1510 = sbr.rel (0) target = $region21
  $region20: #{conv_trans_block.1} parent=0 // pred_region
    _
  $region21: #{conv_trans_block.1} parent=0 // pred_fallthru
    _
  // Predicated region
  $region22: #{conv_trans_block.1} parent=0 // pred_check
    _
  $region23: #{conv_trans_block.1} parent=0 // pred_check_branch
    %1512 = sbr.rel (0) target = $region25
  $region24: #{conv_trans_block.1} parent=0 // pred_region
    _
  $region25: #{conv_trans_block.1} parent=0 // pred_fallthru
    _

</llo_original>
